<compile_context>
chip_gen: v5e
topology: v5e:2x2
jax: 0.10.0
libtpu: 0.0.40
codegen_flags: <defaults>
</compile_context>

<pallas_src>
import jax
import jax.numpy as jnp
from jax import lax
from jax.experimental import pallas as pl
from jax.experimental.pallas import tpu as pltpu


def _vmem():
    return pl.BlockSpec(memory_space=pltpu.MemorySpace.VMEM)


def _round_up_lanes(p):
    return ((p + 127) // 128) * 128


def _pick_h_tile(H):
    # Largest lane-aligned tile that still gives >= 2 grid steps (pipelining);
    # fall back to the full H (grid of 1) for small hidden sizes.
    for th in (2048, 1024, 512, 256, 128):
        if H % th == 0 and H // th >= 2:
            return th
    return H


# ----------------------------------------------------------------------------
# Fused train kernel: pdist + get_pairs (argmin) + gather + interaction + fc,
# with map1/map2 weights streamed by H-tiles over the grid axis.
# ----------------------------------------------------------------------------
def psi_train_kernel(x_ref, labc_ref, labr_ref, w1a_ref, w1b_ref, b1_ref,
                     w2_ref, b2_ref, wfc_ref, bfc_ref,
                     logits_ref, idx_ref,
                     f2_scr, m2_scr, stacked_scr, idx_scr):
    k = pl.program_id(0)
    nk = pl.num_programs(0)

    x = x_ref[...]                                                   # (B, D) f32
    B = x.shape[0]

    # ---- step 0: pdist, pair selection, partner gather ----------------------
    @pl.when(k == 0)
    def _():
        # Gram matrix in f32 (pair selection must not run in bf16).
        g = lax.dot_general(x, x, (((1,), (1,)), ((), ())),
                            preferred_element_type=jnp.float32)      # (B, B)
        row_ids = lax.broadcasted_iota(jnp.int32, (B, B), 0)
        col_ids = lax.broadcasted_iota(jnp.int32, (B, B), 1)
        eye = row_ids == col_ids
        # Per-row argmin is invariant to the row-constant |x_i|^2 term, so only
        # the column norms (Gram diagonal) are needed.
        sq_row = jnp.sum(jnp.where(eye, g, 0.0), axis=0, keepdims=True)  # (1,B)
        dist = sq_row - 2.0 * g

        lb_eq = labc_ref[...] == labr_ref[...]                       # (B, B)
        inf = jnp.float32(jnp.inf)

        # nearest same-class (excluding self); first-occurrence argmin
        same_mask = jnp.logical_and(lb_eq, jnp.logical_not(eye))
        dist_same = jnp.where(same_mask, dist, inf)
        min_same = jnp.min(dist_same, axis=1, keepdims=True)
        intra_idx = jnp.min(jnp.where(dist_same == min_same, col_ids, B),
                            axis=1, keepdims=True)                   # (B, 1)

        # nearest other-class
        diff_mask = jnp.logical_or(lb_eq, eye)
        dist_diff = jnp.where(diff_mask, inf, dist)
        min_diff = jnp.min(dist_diff, axis=1, keepdims=True)
        inter_idx = jnp.min(jnp.where(dist_diff == min_diff, col_ids, B),
                            axis=1, keepdims=True)                   # (B, 1)

        # lane-dense index slab: col 0 = intra, col 1 = inter
        lane = lax.broadcasted_iota(jnp.int32, idx_scr.shape, 1)
        idx_scr[...] = jnp.where(lane == 0, intra_idx,
                                 jnp.where(lane == 1, inter_idx, 0))

        # fused one-hot gather: f2 = [x[intra]; x[inter]] in one (2B,B)@(B,D)
        col2 = lax.broadcasted_iota(jnp.int32, (2 * B, B), 1)
        idx2 = jnp.concatenate([intra_idx, inter_idx], axis=0)       # (2B, 1)
        onehot = jnp.where(col2 == idx2, 1.0, 0.0)
        f2_scr[...] = jnp.dot(onehot, x, preferred_element_type=jnp.float32)

        m2_scr[...] = jnp.zeros_like(m2_scr)

    # ---- every step: map1 (H-tile) -> map2 partial accumulation -------------
    # f1 = [x; x]  =>  the f1 half of map1 is computed once on B rows.
    x_bf = x.astype(jnp.bfloat16)
    f2_bf = f2_scr[...].astype(jnp.bfloat16)
    ht = jnp.dot(x_bf, w1a_ref[...], preferred_element_type=jnp.float32)   # (B, TH)
    hb = jnp.dot(f2_bf, w1b_ref[...], preferred_element_type=jnp.float32)  # (2B, TH)
    h = jnp.concatenate([ht, ht], axis=0) + hb + b1_ref[...]               # (2B, TH)
    # TODO(synk): nn.Dropout between map1 and map2 is stochastic; treated as
    # identity (p = 0) here.
    m2_scr[...] += jnp.dot(h.astype(jnp.bfloat16), w2_ref[...],
                           preferred_element_type=jnp.float32)             # (2B, D)

    # ---- last step: gates + fused lane-dense fc ------------------------------
    @pl.when(k == nk - 1)
    def _():
        f1 = jnp.concatenate([x, x], axis=0)                         # (2B, D) f32
        f2 = f2_scr[...]
        m2 = m2_scr[...] + b2_ref[...]

        gate1 = jax.nn.sigmoid(m2 * f1)
        gate2 = jax.nn.sigmoid(m2 * f2)

        n2 = 2 * B
        stacked_scr[0 * n2:1 * n2, :] = (gate1 * f1 + f1).astype(jnp.bfloat16)
        stacked_scr[1 * n2:2 * n2, :] = (gate2 * f1 + f1).astype(jnp.bfloat16)
        stacked_scr[2 * n2:3 * n2, :] = (gate2 * f2 + f2).astype(jnp.bfloat16)
        stacked_scr[3 * n2:4 * n2, :] = (gate1 * f2 + f2).astype(jnp.bfloat16)

        logits_ref[...] = (jnp.dot(stacked_scr[...], wfc_ref[...],
                                   preferred_element_type=jnp.float32)
                           + bfc_ref[...])                           # (8B, 128)
        idx_ref[...] = idx_scr[...]


def psi_train(pool_out, targets, p, num_polarities):
    B, D = pool_out.shape
    H = p["b1"].shape[1]
    TH = _pick_h_tile(H)
    grid = (H // TH,)

    lab = targets.astype(jnp.int32)
    labc = lab.reshape(B, 1)
    labr = lab.reshape(1, B)

    logits_pad, idx_slab = pl.pallas_call(
        psi_train_kernel,
        grid_spec=pltpu.PrefetchScalarGridSpec(
            num_scalar_prefetch=0,
            grid=grid,
            in_specs=[
                pl.BlockSpec((B, D), lambda k: (0, 0)),       # x
                pl.BlockSpec((B, 1), lambda k: (0, 0)),       # labels (col)
                pl.BlockSpec((1, B), lambda k: (0, 0)),       # labels (row)
                pl.BlockSpec((D, TH), lambda k: (0, k)),      # w1[:D] tile
                pl.BlockSpec((D, TH), lambda k: (0, k)),      # w1[D:] tile
                pl.BlockSpec((1, TH), lambda k: (0, k)),      # b1 tile
                pl.BlockSpec((TH, D), lambda k: (k, 0)),      # w2 tile
                pl.BlockSpec((1, D), lambda k: (0, 0)),       # b2
                pl.BlockSpec((D, 128), lambda k: (0, 0)),     # wfc (padded)
                pl.BlockSpec((1, 128), lambda k: (0, 0)),     # bfc (padded)
            ],
            out_specs=[
                pl.BlockSpec((8 * B, 128), lambda k: (0, 0)),
                pl.BlockSpec((B, 128), lambda k: (0, 0)),
            ],
            scratch_shapes=[
                pltpu.VMEM((2 * B, D), jnp.float32),          # f2
                pltpu.VMEM((2 * B, D), jnp.float32),          # m2 accumulator
                pltpu.VMEM((8 * B, D), jnp.bfloat16),         # stacked features
                pltpu.VMEM((B, 128), jnp.int32),              # idx slab
            ]),
        out_shape=(jax.ShapeDtypeStruct((8 * B, 128), jnp.float32),
                   jax.ShapeDtypeStruct((B, 128), jnp.int32)),
        compiler_params=pltpu.CompilerParams(
            dimension_semantics=("arbitrary",),
            vmem_limit_bytes=32 * 1024 * 1024),
    )(pool_out, labc, labr, p["w1a"], p["w1b"], p["b1"], p["w2"], p["b2"],
      p["wfc"], p["bfc"])

    P = num_polarities
    logits = logits_pad[:, :P]
    N = 2 * B
    l1s = logits[0 * N:1 * N]
    l1o = logits[1 * N:2 * N]
    l2s = logits[2 * N:3 * N]
    l2o = logits[3 * N:4 * N]

    intra = idx_slab[:, 0]
    inter = idx_slab[:, 1]
    labels1 = jnp.concatenate([targets, targets], axis=0)
    labels2 = jnp.concatenate([targets[intra], targets[inter]], axis=0)
    return l1s, l1o, l2s, l2o, labels1, labels2


# ----------------------------------------------------------------------------
# Val branch: self.fc(pool_out) as a single lane-dense linear kernel
# ----------------------------------------------------------------------------
def fc_kernel(x_ref, w_ref, b_ref, o_ref):
    o_ref[...] = (jnp.dot(x_ref[...].astype(jnp.bfloat16), w_ref[...],
                          preferred_element_type=jnp.float32) + b_ref[...])


def psi_val(pool_out, p, num_polarities):
    B, _ = pool_out.shape
    Pp = p["wfc"].shape[1]
    out = pl.pallas_call(
        fc_kernel,
        in_specs=[_vmem()] * 3,
        out_specs=_vmem(),
        out_shape=jax.ShapeDtypeStruct((B, Pp), jnp.float32),
    )(pool_out, p["wfc"], p["bfc"])
    return out[:, :num_polarities]


_psi_train_jit = jax.jit(psi_train, static_argnums=(3,))
_psi_val_jit = jax.jit(psi_val, static_argnums=(2,))


# ----------------------------------------------------------------------------
# PSI.forward
# ----------------------------------------------------------------------------
# TODO(synk): self.bert(...) (external BERT encoder) is not translatable; the
# pooled output `pool_out` [B, bert_dim] is taken directly as the input here.
def psi_forward(pool_out, targets, prepped_params, num_polarities, flag="train"):
    if flag == "train":
        return _psi_train_jit(pool_out, targets, prepped_params, num_polarities)
    elif flag == "val":
        return _psi_val_jit(pool_out, prepped_params, num_polarities)


def init_params(key, bert_dim, hidden, polarities):
    ks = jax.random.split(key, 6)
    s = 0.05
    return {
        "w1": s * jax.random.normal(ks[0], (2 * bert_dim, hidden), jnp.float32),
        "b1": s * jax.random.normal(ks[1], (hidden,), jnp.float32),
        "w2": s * jax.random.normal(ks[2], (hidden, bert_dim), jnp.float32),
        "b2": s * jax.random.normal(ks[3], (bert_dim,), jnp.float32),
        "wfc": s * jax.random.normal(ks[4], (bert_dim, polarities), jnp.float32),
        "bfc": s * jax.random.normal(ks[5], (polarities,), jnp.float32),
    }


def prepare_params(params):
    """One-time padding / splitting / bf16 casting of the kernel weights."""
    D2, H = params["w1"].shape
    D = D2 // 2
    P = params["wfc"].shape[1]
    Pp = _round_up_lanes(P)
    wfc_pad = jnp.zeros((D, Pp), jnp.float32).at[:, :P].set(params["wfc"])
    bfc_pad = jnp.zeros((1, Pp), jnp.float32).at[:, :P].set(
        params["bfc"].reshape(1, P))
    prepped = {
        "w1a": params["w1"][:D].astype(jnp.bfloat16),
        "w1b": params["w1"][D:].astype(jnp.bfloat16),
        "b1": params["b1"].reshape(1, H).astype(jnp.float32),
        "w2": params["w2"].astype(jnp.bfloat16),
        "b2": params["b2"].reshape(1, D).astype(jnp.float32),
        "wfc": wfc_pad.astype(jnp.bfloat16),
        "bfc": bfc_pad,
    }
    return prepped, P


if __name__ == "__main__":
    B, BERT_DIM, HIDDEN, POLARITIES = 8, 32, 512, 3

    key = jax.random.PRNGKey(0)
    k_pool, k_tgt, k_par = jax.random.split(key, 3)

    # Stand-in for the BERT pooled output and the sentiment targets.
    pool_out = jax.random.normal(k_pool, (B, BERT_DIM), jnp.float32)
    targets = jax.random.randint(k_tgt, (B,), 0, POLARITIES)
    params = init_params(k_par, BERT_DIM, HIDDEN, POLARITIES)
    prepped, P = prepare_params(params)

    train_out = psi_forward(pool_out, targets, prepped, P, flag="train")
    val_out = psi_forward(pool_out, targets, prepped, P, flag="val")

    jax.block_until_ready(train_out)
    jax.block_until_ready(val_out)

    l1s, l1o, l2s, l2o, labels1, labels2 = train_out
    assert l1s.shape == (2 * B, POLARITIES)
    assert l1o.shape == (2 * B, POLARITIES)
    assert l2s.shape == (2 * B, POLARITIES)
    assert l2o.shape == (2 * B, POLARITIES)
    assert labels1.shape == (2 * B,) and labels2.shape == (2 * B,)
    assert val_out.shape == (B, POLARITIES)
    assert bool(jnp.all(jnp.isfinite(l1s)))
    assert bool(jnp.all(jnp.isfinite(val_out)))

    print("KERNEL_OK")
</pallas_src>

<mosaic_0001>
module attributes {stable_mosaic.version = 11 : i64} {
  func.func @psi_train_kernel(%arg0: i32, %arg1: memref<8x32xf32, #tpu.memory_space<vmem>>, %arg2: memref<8x1xi32, #tpu.memory_space<vmem>>, %arg3: memref<1x8xi32, #tpu.memory_space<vmem>>, %arg4: memref<32x256xbf16, #tpu.memory_space<vmem>>, %arg5: memref<32x256xbf16, #tpu.memory_space<vmem>>, %arg6: memref<1x256xf32, #tpu.memory_space<vmem>>, %arg7: memref<256x32xbf16, #tpu.memory_space<vmem>>, %arg8: memref<1x32xf32, #tpu.memory_space<vmem>>, %arg9: memref<32x128xbf16, #tpu.memory_space<vmem>>, %arg10: memref<1x128xf32, #tpu.memory_space<vmem>>, %arg11: memref<64x128xf32, #tpu.memory_space<vmem>>, %arg12: memref<8x128xi32, #tpu.memory_space<vmem>>, %arg13: memref<16x32xf32, #tpu.memory_space<vmem>>, %arg14: memref<16x32xf32, #tpu.memory_space<vmem>>, %arg15: memref<64x32xbf16, #tpu.memory_space<vmem>>, %arg16: memref<8x128xi32, #tpu.memory_space<vmem>>) attributes {dimension_semantics = [#tpu.dimension_semantics<arbitrary>], iteration_bounds = array<i64: 2>, scalar_prefetch = 0 : i64, scratch_operands = 4 : i64, tpu.core_type = #tpu.core_type<tc>, window_params = [{pipeline_mode = #tpu.pipeline_mode<synchronous>, transform_indices = @transform_0, window_bounds = array<i64: 8, 32>}, {pipeline_mode = #tpu.pipeline_mode<synchronous>, transform_indices = @transform_1, window_bounds = array<i64: 8, 1>}, {pipeline_mode = #tpu.pipeline_mode<synchronous>, transform_indices = @transform_2, window_bounds = array<i64: 1, 8>}, {transform_indices = @transform_3, window_bounds = array<i64: 32, 256>}, {transform_indices = @transform_4, window_bounds = array<i64: 32, 256>}, {transform_indices = @transform_5, window_bounds = array<i64: 1, 256>}, {transform_indices = @transform_6, window_bounds = array<i64: 256, 32>}, {pipeline_mode = #tpu.pipeline_mode<synchronous>, transform_indices = @transform_7, window_bounds = array<i64: 1, 32>}, {pipeline_mode = #tpu.pipeline_mode<synchronous>, transform_indices = @transform_8, window_bounds = array<i64: 32, 128>}, {pipeline_mode = #tpu.pipeline_mode<synchronous>, transform_indices = @transform_9, window_bounds = array<i64: 1, 128>}, {pipeline_mode = #tpu.pipeline_mode<synchronous>, transform_indices = @transform_10, window_bounds = array<i64: 64, 128>}, {pipeline_mode = #tpu.pipeline_mode<synchronous>, transform_indices = @transform_11, window_bounds = array<i64: 8, 128>}]} {
    %c0 = arith.constant 0 : index
    %c0_0 = arith.constant 0 : index
    %0 = vector.load %arg1[%c0, %c0_0] : memref<8x32xf32, #tpu.memory_space<vmem>>, vector<8x32xf32>
    %c0_i32 = arith.constant 0 : i32
    %1 = arith.cmpi eq, %arg0, %c0_i32 : i32
    %2 = arith.extui %1 : i1 to i32
    %c0_i32_1 = arith.constant 0 : i32
    %3 = arith.cmpi ne, %2, %c0_i32_1 : i32
    scf.if %3 {
      %cst_19 = arith.constant dense<0.000000e+00> : vector<8x8xf32>
      %25 = tpu.matmul %0, %0, %cst_19 {dimension_numbers = #tpu.dot_dimension_numbers<[1], [1], [0], [0], [0, 0, 1, 0], [], []>} : vector<8x32xf32>, vector<8x32xf32>, vector<8x8xf32> -> vector<8x8xf32>
      %26 = tpu.iota {dimensions = array<i32: 0>} : vector<8x8xi32>
      %27 = tpu.iota {dimensions = array<i32: 1>} : vector<8x8xi32>
      %28 = arith.cmpi eq, %26, %27 : vector<8x8xi32>
      %cst_20 = arith.constant 0.000000e+00 : f32
      %29 = vector.broadcast %cst_20 : f32 to vector<8x8xf32>
      %30 = arith.select %28, %25, %29 : vector<8x8xi1>, vector<8x8xf32>
      %cst_21 = arith.constant dense<0.000000e+00> : vector<8xf32>
      %31 = vector.multi_reduction <add>, %30, %cst_21 [0] : vector<8x8xf32> to vector<8xf32>
      %32 = vector.shape_cast %31 : vector<8xf32> to vector<1x8xf32>
      %cst_22 = arith.constant 2.000000e+00 : f32
      %33 = vector.broadcast %cst_22 : f32 to vector<8x8xf32>
      %34 = arith.mulf %33, %25 : vector<8x8xf32>
      %35 = vector.broadcast %32 : vector<1x8xf32> to vector<8x8xf32>
      %36 = arith.subf %35, %34 : vector<8x8xf32>
      %c0_23 = arith.constant 0 : index
      %c0_24 = arith.constant 0 : index
      %37 = vector.load %arg2[%c0_23, %c0_24] : memref<8x1xi32, #tpu.memory_space<vmem>>, vector<8x1xi32>
      %c0_25 = arith.constant 0 : index
      %c0_26 = arith.constant 0 : index
      %38 = vector.load %arg3[%c0_25, %c0_26] : memref<1x8xi32, #tpu.memory_space<vmem>>, vector<1x8xi32>
      %39 = vector.broadcast %37 : vector<8x1xi32> to vector<8x8xi32>
      %40 = vector.broadcast %38 : vector<1x8xi32> to vector<8x8xi32>
      %41 = arith.cmpi eq, %39, %40 : vector<8x8xi32>
      %cst_27 = arith.constant dense<true> : vector<8x8xi1>
      %42 = arith.xori %28, %cst_27 : vector<8x8xi1>
      %43 = arith.andi %41, %42 : vector<8x8xi1>
      %cst_28 = arith.constant 0x7F800000 : f32
      %44 = vector.broadcast %cst_28 : f32 to vector<8x8xf32>
      %45 = arith.select %43, %36, %44 : vector<8x8xi1>, vector<8x8xf32>
      %cst_29 = arith.constant dense<0x7F800000> : vector<8xf32>
      %46 = vector.multi_reduction <minimumf>, %45, %cst_29 [1] : vector<8x8xf32> to vector<8xf32>
      %47 = vector.shape_cast %46 : vector<8xf32> to vector<8x1xf32>
      %48 = vector.broadcast %47 : vector<8x1xf32> to vector<8x8xf32>
      %49 = arith.cmpf oeq, %45, %48 : vector<8x8xf32>
      %c8_i32 = arith.constant 8 : i32
      %50 = vector.broadcast %c8_i32 : i32 to vector<8x8xi32>
      %51 = arith.select %49, %27, %50 : vector<8x8xi1>, vector<8x8xi32>
      %cst_30 = arith.constant dense<2147483647> : vector<8xi32>
      %52 = vector.multi_reduction <minsi>, %51, %cst_30 [1] : vector<8x8xi32> to vector<8xi32>
      %53 = vector.shape_cast %52 : vector<8xi32> to vector<8x1xi32>
      %54 = arith.ori %41, %28 : vector<8x8xi1>
      %cst_31 = arith.constant 0x7F800000 : f32
      %55 = vector.broadcast %cst_31 : f32 to vector<8x8xf32>
      %56 = arith.select %54, %55, %36 : vector<8x8xi1>, vector<8x8xf32>
      %cst_32 = arith.constant dense<0x7F800000> : vector<8xf32>
      %57 = vector.multi_reduction <minimumf>, %56, %cst_32 [1] : vector<8x8xf32> to vector<8xf32>
      %58 = vector.shape_cast %57 : vector<8xf32> to vector<8x1xf32>
      %59 = vector.broadcast %58 : vector<8x1xf32> to vector<8x8xf32>
      %60 = arith.cmpf oeq, %56, %59 : vector<8x8xf32>
      %c8_i32_33 = arith.constant 8 : i32
      %61 = vector.broadcast %c8_i32_33 : i32 to vector<8x8xi32>
      %62 = arith.select %60, %27, %61 : vector<8x8xi1>, vector<8x8xi32>
      %cst_34 = arith.constant dense<2147483647> : vector<8xi32>
      %63 = vector.multi_reduction <minsi>, %62, %cst_34 [1] : vector<8x8xi32> to vector<8xi32>
      %64 = vector.shape_cast %63 : vector<8xi32> to vector<8x1xi32>
      %65 = tpu.iota {dimensions = array<i32: 1>} : vector<8x128xi32>
      %c0_i32_35 = arith.constant 0 : i32
      %66 = vector.broadcast %c0_i32_35 : i32 to vector<8x128xi32>
      %67 = arith.cmpi eq, %65, %66 : vector<8x128xi32>
      %c1_i32_36 = arith.constant 1 : i32
      %68 = vector.broadcast %c1_i32_36 : i32 to vector<8x128xi32>
      %69 = arith.cmpi eq, %65, %68 : vector<8x128xi32>
      %c0_i32_37 = arith.constant 0 : i32
      %70 = vector.shape_cast %64 : vector<8x1xi32> to vector<8x1xi32>
      %71 = vector.broadcast %70 : vector<8x1xi32> to vector<8x128xi32>
      %72 = vector.broadcast %c0_i32_37 : i32 to vector<8x128xi32>
      %73 = arith.select %69, %71, %72 : vector<8x128xi1>, vector<8x128xi32>
      %74 = vector.shape_cast %53 : vector<8x1xi32> to vector<8x1xi32>
      %75 = vector.broadcast %74 : vector<8x1xi32> to vector<8x128xi32>
      %76 = arith.select %67, %75, %73 : vector<8x128xi1>, vector<8x128xi32>
      %c0_38 = arith.constant 0 : index
      %c0_39 = arith.constant 0 : index
      %77 = vector.load %arg16[%c0_38, %c0_39] : memref<8x128xi32, #tpu.memory_space<vmem>>, vector<8x128xi32>
      tpu.vector_store %arg16[%c0_38, %c0_39], %76 {strides = array<i32>} : memref<8x128xi32, #tpu.memory_space<vmem>>, vector<8x128xi32>,
      %78 = tpu.iota {dimensions = array<i32: 1>} : vector<16x8xi32>
      %79 = tpu.concatenate %53, %64 in 0 : vector<8x1xi32>, vector<8x1xi32> -> vector<16x1xi32>
      %80 = vector.broadcast %79 : vector<16x1xi32> to vector<16x8xi32>
      %81 = arith.cmpi eq, %78, %80 : vector<16x8xi32>
      %cst_40 = arith.constant 1.000000e+00 : f32
      %cst_41 = arith.constant 0.000000e+00 : f32
      %82 = vector.broadcast %cst_40 : f32 to vector<16x8xf32>
      %83 = vector.broadcast %cst_41 : f32 to vector<16x8xf32>
      %84 = arith.select %81, %82, %83 : vector<16x8xi1>, vector<16x8xf32>
      %cst_42 = arith.constant dense<0.000000e+00> : vector<16x32xf32>
      %85 = tpu.matmul %84, %0, %cst_42 {dimension_numbers = #tpu.dot_dimension_numbers<[1], [0], [0], [1], [0, 0, 1, 1], [], []>} : vector<16x8xf32>, vector<8x32xf32>, vector<16x32xf32> -> vector<16x32xf32>
      %c0_43 = arith.constant 0 : index
      %c0_44 = arith.constant 0 : index
      %86 = vector.load %arg13[%c0_43, %c0_44] : memref<16x32xf32, #tpu.memory_space<vmem>>, vector<16x32xf32>
      tpu.vector_store %arg13[%c0_43, %c0_44], %85 {strides = array<i32>} : memref<16x32xf32, #tpu.memory_space<vmem>>, vector<16x32xf32>,
      %cst_45 = arith.constant 0.000000e+00 : f32
      %87 = vector.broadcast %cst_45 : f32 to vector<16x32xf32>
      %c0_46 = arith.constant 0 : index
      %c0_47 = arith.constant 0 : index
      %88 = vector.load %arg14[%c0_46, %c0_47] : memref<16x32xf32, #tpu.memory_space<vmem>>, vector<16x32xf32>
      tpu.vector_store %arg14[%c0_46, %c0_47], %87 {strides = array<i32>} : memref<16x32xf32, #tpu.memory_space<vmem>>, vector<16x32xf32>,
    } else {
    }
    %4 = arith.truncf %0 : vector<8x32xf32> to vector<8x32xbf16>
    %c0_2 = arith.constant 0 : index
    %c0_3 = arith.constant 0 : index
    %5 = vector.load %arg13[%c0_2, %c0_3] : memref<16x32xf32, #tpu.memory_space<vmem>>, vector<16x32xf32>
    %6 = arith.truncf %5 : vector<16x32xf32> to vector<16x32xbf16>
    %c0_4 = arith.constant 0 : index
    %c0_5 = arith.constant 0 : index
    %7 = vector.load %arg4[%c0_4, %c0_5] : memref<32x256xbf16, #tpu.memory_space<vmem>>, vector<32x256xbf16>
    %cst = arith.constant dense<0.000000e+00> : vector<8x256xf32>
    %8 = tpu.matmul %4, %7, %cst {dimension_numbers = #tpu.dot_dimension_numbers<[1], [0], [0], [1], [0, 0, 1, 1], [], []>} : vector<8x32xbf16>, vector<32x256xbf16>, vector<8x256xf32> -> vector<8x256xf32>
    %c0_6 = arith.constant 0 : index
    %c0_7 = arith.constant 0 : index
    %9 = vector.load %arg5[%c0_6, %c0_7] : memref<32x256xbf16, #tpu.memory_space<vmem>>, vector<32x256xbf16>
    %cst_8 = arith.constant dense<0.000000e+00> : vector<16x256xf32>
    %10 = tpu.matmul %6, %9, %cst_8 {dimension_numbers = #tpu.dot_dimension_numbers<[1], [0], [0], [1], [0, 0, 1, 1], [], []>} : vector<16x32xbf16>, vector<32x256xbf16>, vector<16x256xf32> -> vector<16x256xf32>
    %11 = tpu.concatenate %8, %8 in 0 : vector<8x256xf32>, vector<8x256xf32> -> vector<16x256xf32>
    %12 = arith.addf %11, %10 : vector<16x256xf32>
    %c0_9 = arith.constant 0 : index
    %c0_10 = arith.constant 0 : index
    %13 = vector.load %arg6[%c0_9, %c0_10] : memref<1x256xf32, #tpu.memory_space<vmem>>, vector<1x256xf32>
    %14 = vector.broadcast %13 : vector<1x256xf32> to vector<16x256xf32>
    %15 = arith.addf %12, %14 : vector<16x256xf32>
    %c0_11 = arith.constant 0 : index
    %c0_12 = arith.constant 0 : index
    %16 = vector.load %arg14[%c0_11, %c0_12] : memref<16x32xf32, #tpu.memory_space<vmem>>, vector<16x32xf32>
    %17 = arith.truncf %15 : vector<16x256xf32> to vector<16x256xbf16>
    %c0_13 = arith.constant 0 : index
    %c0_14 = arith.constant 0 : index
    %18 = vector.load %arg7[%c0_13, %c0_14] : memref<256x32xbf16, #tpu.memory_space<vmem>>, vector<256x32xbf16>
    %cst_15 = arith.constant dense<0.000000e+00> : vector<16x32xf32>
    %19 = tpu.matmul %17, %18, %cst_15 {dimension_numbers = #tpu.dot_dimension_numbers<[1], [0], [0], [1], [0, 0, 1, 1], [], []>} : vector<16x256xbf16>, vector<256x32xbf16>, vector<16x32xf32> -> vector<16x32xf32>
    %20 = arith.addf %16, %19 : vector<16x32xf32>
    %c0_16 = arith.constant 0 : index
    %c0_17 = arith.constant 0 : index
    %21 = vector.load %arg14[%c0_16, %c0_17] : memref<16x32xf32, #tpu.memory_space<vmem>>, vector<16x32xf32>
    tpu.vector_store %arg14[%c0_16, %c0_17], %20 {strides = array<i32>} : memref<16x32xf32, #tpu.memory_space<vmem>>, vector<16x32xf32>,
    %c1_i32 = arith.constant 1 : i32
    %22 = arith.cmpi eq, %arg0, %c1_i32 : i32
    %23 = arith.extui %22 : i1 to i32
    %c0_i32_18 = arith.constant 0 : i32
    %24 = arith.cmpi ne, %23, %c0_i32_18 : i32
    scf.if %24 {
      %25 = tpu.concatenate %0, %0 in 0 : vector<8x32xf32>, vector<8x32xf32> -> vector<16x32xf32>
      %c0_19 = arith.constant 0 : index
      %c0_20 = arith.constant 0 : index
      %26 = vector.load %arg13[%c0_19, %c0_20] : memref<16x32xf32, #tpu.memory_space<vmem>>, vector<16x32xf32>
      %c0_21 = arith.constant 0 : index
      %c0_22 = arith.constant 0 : index
      %27 = vector.load %arg14[%c0_21, %c0_22] : memref<16x32xf32, #tpu.memory_space<vmem>>, vector<16x32xf32>
      %c0_23 = arith.constant 0 : index
      %c0_24 = arith.constant 0 : index
      %28 = vector.load %arg8[%c0_23, %c0_24] : memref<1x32xf32, #tpu.memory_space<vmem>>, vector<1x32xf32>
      %29 = vector.broadcast %28 : vector<1x32xf32> to vector<16x32xf32>
      %30 = arith.addf %27, %29 : vector<16x32xf32>
      %31 = arith.mulf %30, %25 : vector<16x32xf32>
      %32 = arith.negf %31 : vector<16x32xf32>
      %33 = math.exp %32 : vector<16x32xf32>
      %cst_25 = arith.constant 1.000000e+00 : f32
      %34 = vector.broadcast %cst_25 : f32 to vector<16x32xf32>
      %35 = arith.addf %34, %33 : vector<16x32xf32>
      %36 = arith.divf %34, %35 : vector<16x32xf32>
      %37 = arith.mulf %30, %26 : vector<16x32xf32>
      %38 = arith.negf %37 : vector<16x32xf32>
      %39 = math.exp %38 : vector<16x32xf32>
      %cst_26 = arith.constant 1.000000e+00 : f32
      %40 = vector.broadcast %cst_26 : f32 to vector<16x32xf32>
      %41 = arith.addf %40, %39 : vector<16x32xf32>
      %42 = arith.divf %40, %41 : vector<16x32xf32>
      %43 = arith.mulf %36, %25 : vector<16x32xf32>
      %44 = arith.addf %43, %25 : vector<16x32xf32>
      %45 = arith.truncf %44 : vector<16x32xf32> to vector<16x32xbf16>
      %c0_27 = arith.constant 0 : index
      %c0_28 = arith.constant 0 : index
      %46 = vector.load %arg15[%c0_27, %c0_28] : memref<64x32xbf16, #tpu.memory_space<vmem>>, vector<16x32xbf16>
      tpu.vector_store %arg15[%c0_27, %c0_28], %45 {strides = array<i32>} : memref<64x32xbf16, #tpu.memory_space<vmem>>, vector<16x32xbf16>,
      %47 = arith.mulf %42, %25 : vector<16x32xf32>
      %48 = arith.addf %47, %25 : vector<16x32xf32>
      %49 = arith.truncf %48 : vector<16x32xf32> to vector<16x32xbf16>
      %c16 = arith.constant 16 : index
      %c0_29 = arith.constant 0 : index
      %50 = vector.load %arg15[%c16, %c0_29] : memref<64x32xbf16, #tpu.memory_space<vmem>>, vector<16x32xbf16>
      tpu.vector_store %arg15[%c16, %c0_29], %49 {strides = array<i32>} : memref<64x32xbf16, #tpu.memory_space<vmem>>, vector<16x32xbf16>,
      %51 = arith.mulf %42, %26 : vector<16x32xf32>
      %52 = arith.addf %51, %26 : vector<16x32xf32>
      %53 = arith.truncf %52 : vector<16x32xf32> to vector<16x32xbf16>
      %c32 = arith.constant 32 : index
      %c0_30 = arith.constant 0 : index
      %54 = vector.load %arg15[%c32, %c0_30] : memref<64x32xbf16, #tpu.memory_space<vmem>>, vector<16x32xbf16>
      tpu.vector_store %arg15[%c32, %c0_30], %53 {strides = array<i32>} : memref<64x32xbf16, #tpu.memory_space<vmem>>, vector<16x32xbf16>,
      %55 = arith.mulf %36, %26 : vector<16x32xf32>
      %56 = arith.addf %55, %26 : vector<16x32xf32>
      %57 = arith.truncf %56 : vector<16x32xf32> to vector<16x32xbf16>
      %c48 = arith.constant 48 : index
      %c0_31 = arith.constant 0 : index
      %58 = vector.load %arg15[%c48, %c0_31] : memref<64x32xbf16, #tpu.memory_space<vmem>>, vector<16x32xbf16>
      tpu.vector_store %arg15[%c48, %c0_31], %57 {strides = array<i32>} : memref<64x32xbf16, #tpu.memory_space<vmem>>, vector<16x32xbf16>,
      %c0_32 = arith.constant 0 : index
      %c0_33 = arith.constant 0 : index
      %59 = vector.load %arg15[%c0_32, %c0_33] : memref<64x32xbf16, #tpu.memory_space<vmem>>, vector<64x32xbf16>
      %c0_34 = arith.constant 0 : index
      %c0_35 = arith.constant 0 : index
      %60 = vector.load %arg9[%c0_34, %c0_35] : memref<32x128xbf16, #tpu.memory_space<vmem>>, vector<32x128xbf16>
      %cst_36 = arith.constant dense<0.000000e+00> : vector<64x128xf32>
      %61 = tpu.matmul %59, %60, %cst_36 {dimension_numbers = #tpu.dot_dimension_numbers<[1], [0], [0], [1], [0, 0, 1, 1], [], []>} : vector<64x32xbf16>, vector<32x128xbf16>, vector<64x128xf32> -> vector<64x128xf32>
      %c0_37 = arith.constant 0 : index
      %c0_38 = arith.constant 0 : index
      %62 = vector.load %arg10[%c0_37, %c0_38] : memref<1x128xf32, #tpu.memory_space<vmem>>, vector<1x128xf32>
      %63 = vector.broadcast %62 : vector<1x128xf32> to vector<64x128xf32>
      %64 = arith.addf %61, %63 : vector<64x128xf32>
      %c0_39 = arith.constant 0 : index
      %c0_40 = arith.constant 0 : index
      %65 = vector.load %arg11[%c0_39, %c0_40] : memref<64x128xf32, #tpu.memory_space<vmem>>, vector<64x128xf32>
      tpu.vector_store %arg11[%c0_39, %c0_40], %64 {strides = array<i32>} : memref<64x128xf32, #tpu.memory_space<vmem>>, vector<64x128xf32>,
      %c0_41 = arith.constant 0 : index
      %c0_42 = arith.constant 0 : index
      %66 = vector.load %arg16[%c0_41, %c0_42] : memref<8x128xi32, #tpu.memory_space<vmem>>, vector<8x128xi32>
      %c0_43 = arith.constant 0 : index
      %c0_44 = arith.constant 0 : index
      %67 = vector.load %arg12[%c0_43, %c0_44] : memref<8x128xi32, #tpu.memory_space<vmem>>, vector<8x128xi32>
      tpu.vector_store %arg12[%c0_43, %c0_44], %66 {strides = array<i32>} : memref<8x128xi32, #tpu.memory_space<vmem>>, vector<8x128xi32>,
    } else {
    }
    return
  }
  func.func @transform_0(%arg0: i32) -> (i32, i32) {
    %c0_i32 = arith.constant 0 : i32
    %c0_i32_0 = arith.constant 0 : i32
    %c0_i32_1 = arith.constant 0 : i32
    return %c0_i32, %c0_i32_0 : i32, i32
  }
  func.func @transform_1(%arg0: i32) -> (i32, i32) {
    %c0_i32 = arith.constant 0 : i32
    %c0_i32_0 = arith.constant 0 : i32
    %c0_i32_1 = arith.constant 0 : i32
    return %c0_i32, %c0_i32_0 : i32, i32
  }
  func.func @transform_2(%arg0: i32) -> (i32, i32) {
    %c0_i32 = arith.constant 0 : i32
    %c0_i32_0 = arith.constant 0 : i32
    %c0_i32_1 = arith.constant 0 : i32
    return %c0_i32, %c0_i32_0 : i32, i32
  }
  func.func @transform_3(%arg0: i32) -> (i32, i32) {
    %c0_i32 = arith.constant 0 : i32
    %c0_i32_0 = arith.constant 0 : i32
    return %c0_i32, %arg0 : i32, i32
  }
  func.func @transform_4(%arg0: i32) -> (i32, i32) {
    %c0_i32 = arith.constant 0 : i32
    %c0_i32_0 = arith.constant 0 : i32
    return %c0_i32, %arg0 : i32, i32
  }
  func.func @transform_5(%arg0: i32) -> (i32, i32) {
    %c0_i32 = arith.constant 0 : i32
    %c0_i32_0 = arith.constant 0 : i32
    return %c0_i32, %arg0 : i32, i32
  }
  func.func @transform_6(%arg0: i32) -> (i32, i32) {
    %c0_i32 = arith.constant 0 : i32
    %c0_i32_0 = arith.constant 0 : i32
    return %arg0, %c0_i32 : i32, i32
  }
  func.func @transform_7(%arg0: i32) -> (i32, i32) {
    %c0_i32 = arith.constant 0 : i32
    %c0_i32_0 = arith.constant 0 : i32
    %c0_i32_1 = arith.constant 0 : i32
    return %c0_i32, %c0_i32_0 : i32, i32
  }
  func.func @transform_8(%arg0: i32) -> (i32, i32) {
    %c0_i32 = arith.constant 0 : i32
    %c0_i32_0 = arith.constant 0 : i32
    %c0_i32_1 = arith.constant 0 : i32
    return %c0_i32, %c0_i32_0 : i32, i32
  }
  func.func @transform_9(%arg0: i32) -> (i32, i32) {
    %c0_i32 = arith.constant 0 : i32
    %c0_i32_0 = arith.constant 0 : i32
    %c0_i32_1 = arith.constant 0 : i32
    return %c0_i32, %c0_i32_0 : i32, i32
  }
  func.func @transform_10(%arg0: i32) -> (i32, i32) {
    %c0_i32 = arith.constant 0 : i32
    %c0_i32_0 = arith.constant 0 : i32
    %c0_i32_1 = arith.constant 0 : i32
    return %c0_i32, %c0_i32_0 : i32, i32
  }
  func.func @transform_11(%arg0: i32) -> (i32, i32) {
    %c0_i32 = arith.constant 0 : i32
    %c0_i32_0 = arith.constant 0 : i32
    %c0_i32_1 = arith.constant 0 : i32
    return %c0_i32, %c0_i32_0 : i32, i32
  }
}

</mosaic_0001>

<llo_original>
// kernel: psi_train.1
$region0: #{psi_train.1}
  #allocation0 [shape = 'u32[]', space=smem, size = 0x4, offset = 0x4, fixed_abs, tag = 'smem constant byte address 0x4 - core index']
  #allocation1 [shape = 'u32[72,128]{1,0:T(1,128)}', space=vmem, size = 0x9000, scoped, tag = 'internal scratch']
  #allocation2 [shape = 'f32[16,32]{1,0:T(8,128)}', space=vmem, size = 0x2000, scoped, tag = 'scratch operand']
  #allocation3 [shape = 'f32[16,32]{1,0:T(8,128)}', space=vmem, size = 0x2000, scoped, tag = 'scratch operand']
  #allocation4 [shape = 'bf16[64,32]{1,0:T(8,128)(2,1)}', space=vmem, size = 0x4000, scoped, tag = 'scratch operand']
  #allocation5 [shape = 's32[8,128]{1,0:T(8,128)}', space=vmem, size = 0x1000, scoped, tag = 'scratch operand']
  %s0 = inlined_call_operand.vmem [shape: f32[8,32], index: 0, kind: input, shape index: {}]
  %s1 = inlined_call_operand.vmem [shape: s32[8,1], index: 1, kind: input, shape index: {}]
  %s2 = inlined_call_operand.vmem [shape: s32[1,8], index: 2, kind: input, shape index: {}]
  %s3 = inlined_call_operand.vmem [shape: bf16[32,512], index: 3, kind: input, shape index: {}]
  %s4 = inlined_call_operand.vmem [shape: bf16[32,512], index: 4, kind: input, shape index: {}]
  %s5 = inlined_call_operand.vmem [shape: f32[1,512], index: 5, kind: input, shape index: {}]
  %s6 = inlined_call_operand.vmem [shape: bf16[512,32], index: 6, kind: input, shape index: {}]
  %s7 = inlined_call_operand.vmem [shape: f32[1,32], index: 7, kind: input, shape index: {}]
  %s8 = inlined_call_operand.vmem [shape: bf16[32,128], index: 8, kind: input, shape index: {}]
  %s9 = inlined_call_operand.vmem [shape: f32[1,128], index: 9, kind: input, shape index: {}]
  %s10 = inlined_call_operand.vmem [shape: f32[64,128], index: 10, kind: output, shape index: {0}]
  %s11 = inlined_call_operand.vmem [shape: s32[8,128], index: 11, kind: output, shape index: {1}]
  %12 = xla_tuple %s10, %s11
  %s13 = sld [smem:[#allocation0]]
  $region165: #{psi_train.1} parent=0
    _
  %s15 = ssub.s32 1, %s13
  %s16 = scalar_select 0, %s15, %s13
  $region1: #{psi_train.1} parent=0
    #allocation6 [shape = 'u8[32768]{0}', space=vmem, size = 0x8000, scoped, tag = 'input window, operand 3']
    #allocation7 [shape = 'u8[32768]{0}', space=vmem, size = 0x8000, scoped, tag = 'input window, operand 4']
    loop: start=0, step=1, limit=4
    $region2: #{psi_train.1} parent=1 // loop_pre_header
      _
    $region3: #{psi_train.1} parent=1 // loop_header
      %s18 = sphi 0, %s22
      %p19 = scmp.ge.s32.totalorder %s18, 4
      %s26 = sphi 0, %s26
      %s28 = sphi 0, %s26
      %s29 = sphi 0, %s28
      %s43 = sphi 0, %s29
      %s47 = sphi 0, %s47
      %s49 = sphi 0, %s47
      %s50 = sphi 0, %s49
      %s64 = sphi 0, %s50
      %s68 = sphi 0, %s68
      %s70 = sphi 0, %s68
      %s71 = sphi 0, %s70
      %s85 = sphi 0, %s71
      %s91 = sphi 0, %s93
      %s94 = sphi 0, %s91
      %s95 = sphi 0, %s94
      %s111 = sphi 0, %s95
      %s117 = sphi 0, %s119
      %s120 = sphi 0, %s117
      %s121 = sphi 0, %s120
      %s137 = sphi 0, %s121
      %s143 = sphi 0, %s145
      %s146 = sphi 0, %s143
      %s147 = sphi 0, %s146
      %s163 = sphi 0, %s147
      %s169 = sphi 0, %s171
      %s172 = sphi 0, %s169
      %s173 = sphi 0, %s172
      %s189 = sphi 0, %s173
      %s193 = sphi 0, %s193
      %s195 = sphi 0, %s193
      %s196 = sphi 0, %s195
      %s210 = sphi 0, %s196
      %s214 = sphi 0, %s214
      %s216 = sphi 0, %s214
      %s217 = sphi 0, %s216
      %s231 = sphi 0, %s217
      %s235 = sphi 0, %s235
      %s237 = sphi 0, %s235
      %s238 = sphi 0, %s237
      %s252 = sphi 0, %s238
      %s256 = sphi 0, %s256
      %s258 = sphi 0, %s256
      %s259 = sphi 0, %s258
      %s273 = sphi 0, %s259
      %s277 = sphi 0, %s277
      %s279 = sphi 0, %s277
      %s280 = sphi 0, %s279
      %s294 = sphi 0, %s280
    $region4: #{psi_train.1} parent=1 // loop_header_branch
      %21 = sbr.rel (%p19) target = $region8
    $region5: #{psi_train.1} parent=1 // loop_body
      %s23 = ssub.s32 %s18, 1
      %s24 = ssub.s32 %s18, 2
      %s25 = sadd.s32 %s18, 1
      %s27 = sadd.s32 %s26, 1
      %p30 = scmp.eq.s32.totalorder %s18, 1
      %p31 = scmp.ne.s32.totalorder %s26, %s28
      %p32 = scmp.eq.s32.totalorder %s18, 0
      %p33 = por %p31, %p32
      %p34 = scmp.ne.s32.totalorder %s26, %s28
      %p35 = scmp.eq.s32.totalorder %s23, 1
      %p36 = por %p34, %p35
      %p37 = scmp.ne.s32.totalorder %s28, %s29
      %p38 = scmp.eq.s32.totalorder %s23, 0
      %p39 = por %p37, %p38
      %p40 = scmp.ne.s32.totalorder %s28, %s29
      %p41 = scmp.eq.s32.totalorder %s24, 1
      %p42 = por %p40, %p41
      %p44 = scmp.ne.s32.totalorder %s29, %s43
      %p45 = scmp.eq.s32.totalorder %s24, 0
      %p46 = por %p44, %p45
      %s48 = sadd.s32 %s47, 1
      %p51 = scmp.eq.s32.totalorder %s18, 1
      %p52 = scmp.ne.s32.totalorder %s47, %s49
      %p53 = scmp.eq.s32.totalorder %s18, 0
      %p54 = por %p52, %p53
      %p55 = scmp.ne.s32.totalorder %s47, %s49
      %p56 = scmp.eq.s32.totalorder %s23, 1
      %p57 = por %p55, %p56
      %p58 = scmp.ne.s32.totalorder %s49, %s50
      %p59 = scmp.eq.s32.totalorder %s23, 0
      %p60 = por %p58, %p59
      %p61 = scmp.ne.s32.totalorder %s49, %s50
      %p62 = scmp.eq.s32.totalorder %s24, 1
      %p63 = por %p61, %p62
      %p65 = scmp.ne.s32.totalorder %s50, %s64
      %p66 = scmp.eq.s32.totalorder %s24, 0
      %p67 = por %p65, %p66
      %s69 = sadd.s32 %s68, 1
      %p72 = scmp.eq.s32.totalorder %s18, 1
      %p73 = scmp.ne.s32.totalorder %s68, %s70
      %p74 = scmp.eq.s32.totalorder %s18, 0
      %p75 = por %p73, %p74
      %p76 = scmp.ne.s32.totalorder %s68, %s70
      %p77 = scmp.eq.s32.totalorder %s23, 1
      %p78 = por %p76, %p77
      %p79 = scmp.ne.s32.totalorder %s70, %s71
      %p80 = scmp.eq.s32.totalorder %s23, 0
      %p81 = por %p79, %p80
      %p82 = scmp.ne.s32.totalorder %s70, %s71
      %p83 = scmp.eq.s32.totalorder %s24, 1
      %p84 = por %p82, %p83
      %p86 = scmp.ne.s32.totalorder %s71, %s85
      %p87 = scmp.eq.s32.totalorder %s24, 0
      %p88 = por %p86, %p87
      %s89 = ssub.s32 %s18, %s25
      %p90 = scmp.eq.s32.totalorder %s89, 0
      %s92 = sadd.s32 %s91, 1
      %s93 = scalar_select %p90, %s91, %s92
      %p96 = pneg %p90
      %p97 = scmp.eq.s32.totalorder %s18, 1
      %p98 = por %p96, %p97
      %p99 = scmp.ne.s32.totalorder %s91, %s94
      %p100 = scmp.eq.s32.totalorder %s18, 0
      %p101 = por %p99, %p100
      %p102 = scmp.ne.s32.totalorder %s91, %s94
      %p103 = scmp.eq.s32.totalorder %s23, 1
      %p104 = por %p102, %p103
      %p105 = scmp.ne.s32.totalorder %s94, %s95
      %p106 = scmp.eq.s32.totalorder %s23, 0
      %p107 = por %p105, %p106
      %p108 = scmp.ne.s32.totalorder %s94, %s95
      %p109 = scmp.eq.s32.totalorder %s24, 1
      %p110 = por %p108, %p109
      %p112 = scmp.ne.s32.totalorder %s95, %s111
      %p113 = scmp.eq.s32.totalorder %s24, 0
      %p114 = por %p112, %p113
      %s115 = ssub.s32 %s18, %s25
      %p116 = scmp.eq.s32.totalorder %s115, 0
      %s118 = sadd.s32 %s117, 1
      %s119 = scalar_select %p116, %s117, %s118
      %p122 = pneg %p116
      %p123 = scmp.eq.s32.totalorder %s18, 1
      %p124 = por %p122, %p123
      %p125 = scmp.ne.s32.totalorder %s117, %s120
      %p126 = scmp.eq.s32.totalorder %s18, 0
      %p127 = por %p125, %p126
      %p128 = scmp.ne.s32.totalorder %s117, %s120
      %p129 = scmp.eq.s32.totalorder %s23, 1
      %p130 = por %p128, %p129
      %p131 = scmp.ne.s32.totalorder %s120, %s121
      %p132 = scmp.eq.s32.totalorder %s23, 0
      %p133 = por %p131, %p132
      %p134 = scmp.ne.s32.totalorder %s120, %s121
      %p135 = scmp.eq.s32.totalorder %s24, 1
      %p136 = por %p134, %p135
      %p138 = scmp.ne.s32.totalorder %s121, %s137
      %p139 = scmp.eq.s32.totalorder %s24, 0
      %p140 = por %p138, %p139
      %s141 = ssub.s32 %s18, %s25
      %p142 = scmp.eq.s32.totalorder %s141, 0
      %s144 = sadd.s32 %s143, 1
      %s145 = scalar_select %p142, %s143, %s144
      %p148 = pneg %p142
      %p149 = scmp.eq.s32.totalorder %s18, 1
      %p150 = por %p148, %p149
      %p151 = scmp.ne.s32.totalorder %s143, %s146
      %p152 = scmp.eq.s32.totalorder %s18, 0
      %p153 = por %p151, %p152
      %p154 = scmp.ne.s32.totalorder %s143, %s146
      %p155 = scmp.eq.s32.totalorder %s23, 1
      %p156 = por %p154, %p155
      %p157 = scmp.ne.s32.totalorder %s146, %s147
      %p158 = scmp.eq.s32.totalorder %s23, 0
      %p159 = por %p157, %p158
      %p160 = scmp.ne.s32.totalorder %s146, %s147
      %p161 = scmp.eq.s32.totalorder %s24, 1
      %p162 = por %p160, %p161
      %p164 = scmp.ne.s32.totalorder %s147, %s163
      %p165 = scmp.eq.s32.totalorder %s24, 0
      %p166 = por %p164, %p165
      %s167 = ssub.s32 %s18, %s25
      %p168 = scmp.eq.s32.totalorder %s167, 0
      %s170 = sadd.s32 %s169, 1
      %s171 = scalar_select %p168, %s169, %s170
      %p174 = pneg %p168
      %p175 = scmp.eq.s32.totalorder %s18, 1
      %p176 = por %p174, %p175
      %p177 = scmp.ne.s32.totalorder %s169, %s172
      %p178 = scmp.eq.s32.totalorder %s18, 0
      %p179 = por %p177, %p178
      %p180 = scmp.ne.s32.totalorder %s169, %s172
      %p181 = scmp.eq.s32.totalorder %s23, 1
      %p182 = por %p180, %p181
      %p183 = scmp.ne.s32.totalorder %s172, %s173
      %p184 = scmp.eq.s32.totalorder %s23, 0
      %p185 = por %p183, %p184
      %p186 = scmp.ne.s32.totalorder %s172, %s173
      %p187 = scmp.eq.s32.totalorder %s24, 1
      %p188 = por %p186, %p187
      %p190 = scmp.ne.s32.totalorder %s173, %s189
      %p191 = scmp.eq.s32.totalorder %s24, 0
      %p192 = por %p190, %p191
      %s194 = sadd.s32 %s193, 1
      %p197 = scmp.eq.s32.totalorder %s18, 1
      %p198 = scmp.ne.s32.totalorder %s193, %s195
      %p199 = scmp.eq.s32.totalorder %s18, 0
      %p200 = por %p198, %p199
      %p201 = scmp.ne.s32.totalorder %s193, %s195
      %p202 = scmp.eq.s32.totalorder %s23, 1
      %p203 = por %p201, %p202
      %p204 = scmp.ne.s32.totalorder %s195, %s196
      %p205 = scmp.eq.s32.totalorder %s23, 0
      %p206 = por %p204, %p205
      %p207 = scmp.ne.s32.totalorder %s195, %s196
      %p208 = scmp.eq.s32.totalorder %s24, 1
      %p209 = por %p207, %p208
      %p211 = scmp.ne.s32.totalorder %s196, %s210
      %p212 = scmp.eq.s32.totalorder %s24, 0
      %p213 = por %p211, %p212
      %s215 = sadd.s32 %s214, 1
      %p218 = scmp.eq.s32.totalorder %s18, 1
      %p219 = scmp.ne.s32.totalorder %s214, %s216
      %p220 = scmp.eq.s32.totalorder %s18, 0
      %p221 = por %p219, %p220
      %p222 = scmp.ne.s32.totalorder %s214, %s216
      %p223 = scmp.eq.s32.totalorder %s23, 1
      %p224 = por %p222, %p223
      %p225 = scmp.ne.s32.totalorder %s216, %s217
      %p226 = scmp.eq.s32.totalorder %s23, 0
      %p227 = por %p225, %p226
      %p228 = scmp.ne.s32.totalorder %s216, %s217
      %p229 = scmp.eq.s32.totalorder %s24, 1
      %p230 = por %p228, %p229
      %p232 = scmp.ne.s32.totalorder %s217, %s231
      %p233 = scmp.eq.s32.totalorder %s24, 0
      %p234 = por %p232, %p233
      %s236 = sadd.s32 %s235, 1
      %p239 = scmp.eq.s32.totalorder %s18, 1
      %p240 = scmp.ne.s32.totalorder %s235, %s237
      %p241 = scmp.eq.s32.totalorder %s18, 0
      %p242 = por %p240, %p241
      %p243 = scmp.ne.s32.totalorder %s235, %s237
      %p244 = scmp.eq.s32.totalorder %s23, 1
      %p245 = por %p243, %p244
      %p246 = scmp.ne.s32.totalorder %s237, %s238
      %p247 = scmp.eq.s32.totalorder %s23, 0
      %p248 = por %p246, %p247
      %p249 = scmp.ne.s32.totalorder %s237, %s238
      %p250 = scmp.eq.s32.totalorder %s24, 1
      %p251 = por %p249, %p250
      %p253 = scmp.ne.s32.totalorder %s238, %s252
      %p254 = scmp.eq.s32.totalorder %s24, 0
      %p255 = por %p253, %p254
      %s257 = sadd.s32 %s256, 1
      %p260 = scmp.eq.s32.totalorder %s18, 1
      %p261 = scmp.ne.s32.totalorder %s256, %s258
      %p262 = scmp.eq.s32.totalorder %s18, 0
      %p263 = por %p261, %p262
      %p264 = scmp.ne.s32.totalorder %s256, %s258
      %p265 = scmp.eq.s32.totalorder %s23, 1
      %p266 = por %p264, %p265
      %p267 = scmp.ne.s32.totalorder %s258, %s259
      %p268 = scmp.eq.s32.totalorder %s23, 0
      %p269 = por %p267, %p268
      %p270 = scmp.ne.s32.totalorder %s258, %s259
      %p271 = scmp.eq.s32.totalorder %s24, 1
      %p272 = por %p270, %p271
      %p274 = scmp.ne.s32.totalorder %s259, %s273
      %p275 = scmp.eq.s32.totalorder %s24, 0
      %p276 = por %p274, %p275
      %s278 = sadd.s32 %s277, 1
      %p281 = scmp.eq.s32.totalorder %s18, 1
      %p282 = scmp.ne.s32.totalorder %s277, %s279
      %p283 = scmp.eq.s32.totalorder %s18, 0
      %p284 = por %p282, %p283
      %p285 = scmp.ne.s32.totalorder %s277, %s279
      %p286 = scmp.eq.s32.totalorder %s23, 1
      %p287 = por %p285, %p286
      %p288 = scmp.ne.s32.totalorder %s279, %s280
      %p289 = scmp.eq.s32.totalorder %s23, 0
      %p290 = por %p288, %p289
      %p291 = scmp.ne.s32.totalorder %s279, %s280
      %p292 = scmp.eq.s32.totalorder %s24, 1
      %p293 = por %p291, %p292
      %p295 = scmp.ne.s32.totalorder %s280, %s294
      %p296 = scmp.eq.s32.totalorder %s24, 0
      %p297 = por %p295, %p296
      %p298 = scmp.le.s32.totalorder 1, %s18
      %p299 = scmp.lt.s32.totalorder %s18, 3
      %p300 = pnand %p298, %p299
      %p301 = pneg %p300
      // Predicated region
      $region9: #{psi_train.1} parent=5 // pred_check
        _
      $region10: #{psi_train.1} parent=5 // pred_check_branch
        %303 = sbr.rel (%p300) target = $region12
      $region11: #{psi_train.1} parent=5 // pred_region
        %s304 = ssub.s32 %s18, 1
        // Predicated region
        $region13: #{psi_train.1} parent=11 // pred_check
          %p305 = pneg %p39
        $region14: #{psi_train.1} parent=11 // pred_check_branch
          %307 = sbr.rel (%p305) target = $region16
        $region15: #{psi_train.1} parent=11 // pred_region
          _
        $region16: #{psi_train.1} parent=11 // pred_fallthru
          _
        // Predicated region
        $region17: #{psi_train.1} parent=11 // pred_check
          %p308 = pneg %p60
        $region18: #{psi_train.1} parent=11 // pred_check_branch
          %310 = sbr.rel (%p308) target = $region20
        $region19: #{psi_train.1} parent=11 // pred_region
          _
        $region20: #{psi_train.1} parent=11 // pred_fallthru
          _
        // Predicated region
        $region21: #{psi_train.1} parent=11 // pred_check
          %p311 = pneg %p81
        $region22: #{psi_train.1} parent=11 // pred_check_branch
          %313 = sbr.rel (%p311) target = $region24
        $region23: #{psi_train.1} parent=11 // pred_region
          _
        $region24: #{psi_train.1} parent=11 // pred_fallthru
          _
        // Predicated region
        $region25: #{psi_train.1} parent=11 // pred_check
          %p314 = pneg %p206
        $region26: #{psi_train.1} parent=11 // pred_check_branch
          %316 = sbr.rel (%p314) target = $region28
        $region27: #{psi_train.1} parent=11 // pred_region
          _
        $region28: #{psi_train.1} parent=11 // pred_fallthru
          _
        // Predicated region
        $region29: #{psi_train.1} parent=11 // pred_check
          %p317 = pneg %p227
        $region30: #{psi_train.1} parent=11 // pred_check_branch
          %319 = sbr.rel (%p317) target = $region32
        $region31: #{psi_train.1} parent=11 // pred_region
          _
        $region32: #{psi_train.1} parent=11 // pred_fallthru
          _
        // Predicated region
        $region33: #{psi_train.1} parent=11 // pred_check
          %p320 = pneg %p248
        $region34: #{psi_train.1} parent=11 // pred_check_branch
          %322 = sbr.rel (%p320) target = $region36
        $region35: #{psi_train.1} parent=11 // pred_region
          _
        $region36: #{psi_train.1} parent=11 // pred_fallthru
          _
      $region12: #{psi_train.1} parent=5 // pred_fallthru
        _
      %p323 = scmp.lt.s32.totalorder %s18, 2
      // Predicated region
      $region37: #{psi_train.1} parent=5 // pred_check
        %p324 = pneg %p323
      $region38: #{psi_train.1} parent=5 // pred_check_branch
        %326 = sbr.rel (%p324) target = $region40
      $region39: #{psi_train.1} parent=5 // pred_region
        // Predicated region
        $region41: #{psi_train.1} parent=39 // pred_check
          %p327 = pneg %p101
        $region42: #{psi_train.1} parent=39 // pred_check_branch
          %329 = sbr.rel (%p327) target = $region44
        $region43: #{psi_train.1} parent=39 // pred_region
          %s330 = sand.u32 %s91, 1
          %s331 = sand.u32 %s91, 1
          %s332 = smul.addr %s331, 32
          %s333 = scalar_lea.vmem [#allocation6], %s332
          %s334 = smul.u32 2, %s18
          %s335 = smul.addr %s334, 4
          %s336 = scalar_lea.vmem %s3, %s335
          // Predicated region
          $region45: #{psi_train.1} parent=43 // pred_check
            _
          $region46: #{psi_train.1} parent=43 // pred_check_branch
            %338 = sbr.rel (0) target = $region48
          $region47: #{psi_train.1} parent=43 // pred_region
            // Predicated region
            $region49: #{psi_train.1} parent=47 // pred_check
              _
            $region50: #{psi_train.1} parent=47 // pred_check_branch
              %340 = sbr.rel (0) target = $region52
            $region51: #{psi_train.1} parent=47 // pred_region
              // Predicated region
              $region64: #{psi_train.1} parent=51 // pred_check
                _
              $region65: #{psi_train.1} parent=51 // pred_check_branch
                %362 = sbr.rel (0) target = $region67
              $region66: #{psi_train.1} parent=51 // pred_region
                loop: start=0, step=1, limit=1
                $region68: #{psi_train.1} parent=66 // loop_pre_header
                  _
                $region69: #{psi_train.1} parent=66 // loop_header
                  %s364 = sphi 0, %s368
                  %p365 = scmp.ge.s32.totalorder %s364, 1
                  %s369 = sphi %s336, %s336
                  %s370 = sphi %s333, %s333
                $region70: #{psi_train.1} parent=66 // loop_header_branch
                  %367 = sbr.rel (%p365) target = $region74
                $region71: #{psi_train.1} parent=66 // loop_body
                  %v371 = vld [vmem:[%s369] sm:$0xff]
                  %372 = vst [vmem:[%s370] sm:$0xff] %v371
                  %v373 = vld [vmem:[%s369 + $0x10] sm:$0xff]
                  %374 = vst [vmem:[%s370 + $0x8] sm:$0xff] %v373
                  %v375 = vld [vmem:[%s369 + $0x20] sm:$0xff]
                  %376 = vst [vmem:[%s370 + $0x10] sm:$0xff] %v375
                  %v377 = vld [vmem:[%s369 + $0x30] sm:$0xff]
                  %378 = vst [vmem:[%s370 + $0x18] sm:$0xff] %v377
                $region72: #{psi_train.1} parent=66 // loop_footer
                  %s368 = sadd.s32 1, %s364
                $region73: #{psi_train.1} parent=66 // loop_footer_branch
                  %363 = sbr.rel target = $region69
                $region74: #{psi_train.1} parent=66 // loop_exit
                  _
              $region67: #{psi_train.1} parent=51 // pred_fallthru
                _
              // Predicated region
              $region75: #{psi_train.1} parent=51 // pred_check
                _
              $region76: #{psi_train.1} parent=51 // pred_check_branch
                %380 = sbr.rel target = $region78
              $region77: #{psi_train.1} parent=51 // pred_region
                _
              $region78: #{psi_train.1} parent=51 // pred_fallthru
                _
            $region52: #{psi_train.1} parent=47 // pred_fallthru
              _
            // Predicated region
            $region53: #{psi_train.1} parent=47 // pred_check
              _
            $region54: #{psi_train.1} parent=47 // pred_check_branch
              %342 = sbr.rel target = $region56
            $region55: #{psi_train.1} parent=47 // pred_region
              %s344 = ssub.s32 256, 1
              loop: start=0, step=1, limit=1
              $region57: #{psi_train.1} parent=55 // loop_pre_header
                _
              $region58: #{psi_train.1} parent=55 // loop_header
                %s346 = sphi 0, %s350
                %p347 = scmp.ge.s32.totalorder %s346, 1
                %s351 = sphi %s336, %s336
                %s352 = sphi %s333, %s333
              $region59: #{psi_train.1} parent=55 // loop_header_branch
                %349 = sbr.rel (%p347) target = $region63
              $region60: #{psi_train.1} parent=55 // loop_body
                %v353 = vld [vmem:[%s351] sm:%s344]
                %354 = vst [vmem:[%s352] sm:%s344] %v353
                %v355 = vld [vmem:[%s351 + $0x10] sm:%s344]
                %356 = vst [vmem:[%s352 + $0x8] sm:%s344] %v355
                %v357 = vld [vmem:[%s351 + $0x20] sm:%s344]
                %358 = vst [vmem:[%s352 + $0x10] sm:%s344] %v357
                %v359 = vld [vmem:[%s351 + $0x30] sm:%s344]
                %360 = vst [vmem:[%s352 + $0x18] sm:%s344] %v359
              $region61: #{psi_train.1} parent=55 // loop_footer
                %s350 = sadd.s32 1, %s346
              $region62: #{psi_train.1} parent=55 // loop_footer_branch
                %345 = sbr.rel target = $region58
              $region63: #{psi_train.1} parent=55 // loop_exit
                _
            $region56: #{psi_train.1} parent=47 // pred_fallthru
              _
          $region48: #{psi_train.1} parent=43 // pred_fallthru
            _
          %381 = vnop
        $region44: #{psi_train.1} parent=39 // pred_fallthru
          _
        // Predicated region
        $region79: #{psi_train.1} parent=39 // pred_check
          %p382 = pneg %p127
        $region80: #{psi_train.1} parent=39 // pred_check_branch
          %384 = sbr.rel (%p382) target = $region82
        $region81: #{psi_train.1} parent=39 // pred_region
          %s385 = sand.u32 %s117, 1
          %s386 = sand.u32 %s117, 1
          %s387 = smul.addr %s386, 32
          %s388 = scalar_lea.vmem [#allocation7], %s387
          %s389 = smul.u32 2, %s18
          %s390 = smul.addr %s389, 4
          %s391 = scalar_lea.vmem %s4, %s390
          // Predicated region
          $region83: #{psi_train.1} parent=81 // pred_check
            _
          $region84: #{psi_train.1} parent=81 // pred_check_branch
            %393 = sbr.rel (0) target = $region86
          $region85: #{psi_train.1} parent=81 // pred_region
            // Predicated region
            $region87: #{psi_train.1} parent=85 // pred_check
              _
            $region88: #{psi_train.1} parent=85 // pred_check_branch
              %395 = sbr.rel (0) target = $region90
            $region89: #{psi_train.1} parent=85 // pred_region
              // Predicated region
              $region102: #{psi_train.1} parent=89 // pred_check
                _
              $region103: #{psi_train.1} parent=89 // pred_check_branch
                %417 = sbr.rel (0) target = $region105
              $region104: #{psi_train.1} parent=89 // pred_region
                loop: start=0, step=1, limit=1
                $region106: #{psi_train.1} parent=104 // loop_pre_header
                  _
                $region107: #{psi_train.1} parent=104 // loop_header
                  %s419 = sphi 0, %s423
                  %p420 = scmp.ge.s32.totalorder %s419, 1
                  %s424 = sphi %s391, %s391
                  %s425 = sphi %s388, %s388
                $region108: #{psi_train.1} parent=104 // loop_header_branch
                  %422 = sbr.rel (%p420) target = $region112
                $region109: #{psi_train.1} parent=104 // loop_body
                  %v426 = vld [vmem:[%s424] sm:$0xff]
                  %427 = vst [vmem:[%s425] sm:$0xff] %v426
                  %v428 = vld [vmem:[%s424 + $0x10] sm:$0xff]
                  %429 = vst [vmem:[%s425 + $0x8] sm:$0xff] %v428
                  %v430 = vld [vmem:[%s424 + $0x20] sm:$0xff]
                  %431 = vst [vmem:[%s425 + $0x10] sm:$0xff] %v430
                  %v432 = vld [vmem:[%s424 + $0x30] sm:$0xff]
                  %433 = vst [vmem:[%s425 + $0x18] sm:$0xff] %v432
                $region110: #{psi_train.1} parent=104 // loop_footer
                  %s423 = sadd.s32 1, %s419
                $region111: #{psi_train.1} parent=104 // loop_footer_branch
                  %418 = sbr.rel target = $region107
                $region112: #{psi_train.1} parent=104 // loop_exit
                  _
              $region105: #{psi_train.1} parent=89 // pred_fallthru
                _
              // Predicated region
              $region113: #{psi_train.1} parent=89 // pred_check
                _
              $region114: #{psi_train.1} parent=89 // pred_check_branch
                %435 = sbr.rel target = $region116
              $region115: #{psi_train.1} parent=89 // pred_region
                _
              $region116: #{psi_train.1} parent=89 // pred_fallthru
                _
            $region90: #{psi_train.1} parent=85 // pred_fallthru
              _
            // Predicated region
            $region91: #{psi_train.1} parent=85 // pred_check
              _
            $region92: #{psi_train.1} parent=85 // pred_check_branch
              %397 = sbr.rel target = $region94
            $region93: #{psi_train.1} parent=85 // pred_region
              %s399 = ssub.s32 256, 1
              loop: start=0, step=1, limit=1
              $region95: #{psi_train.1} parent=93 // loop_pre_header
                _
              $region96: #{psi_train.1} parent=93 // loop_header
                %s401 = sphi 0, %s405
                %p402 = scmp.ge.s32.totalorder %s401, 1
                %s406 = sphi %s391, %s391
                %s407 = sphi %s388, %s388
              $region97: #{psi_train.1} parent=93 // loop_header_branch
                %404 = sbr.rel (%p402) target = $region101
              $region98: #{psi_train.1} parent=93 // loop_body
                %v408 = vld [vmem:[%s406] sm:%s399]
                %409 = vst [vmem:[%s407] sm:%s399] %v408
                %v410 = vld [vmem:[%s406 + $0x10] sm:%s399]
                %411 = vst [vmem:[%s407 + $0x8] sm:%s399] %v410
                %v412 = vld [vmem:[%s406 + $0x20] sm:%s399]
                %413 = vst [vmem:[%s407 + $0x10] sm:%s399] %v412
                %v414 = vld [vmem:[%s406 + $0x30] sm:%s399]
                %415 = vst [vmem:[%s407 + $0x18] sm:%s399] %v414
              $region99: #{psi_train.1} parent=93 // loop_footer
                %s405 = sadd.s32 1, %s401
              $region100: #{psi_train.1} parent=93 // loop_footer_branch
                %400 = sbr.rel target = $region96
              $region101: #{psi_train.1} parent=93 // loop_exit
                _
            $region94: #{psi_train.1} parent=85 // pred_fallthru
              _
          $region86: #{psi_train.1} parent=81 // pred_fallthru
            _
          %436 = vnop
        $region82: #{psi_train.1} parent=39 // pred_fallthru
          _
        // Predicated region
        $region117: #{psi_train.1} parent=39 // pred_check
          %p437 = pneg %p153
        $region118: #{psi_train.1} parent=39 // pred_check_branch
          %439 = sbr.rel (%p437) target = $region120
        $region119: #{psi_train.1} parent=39 // pred_region
          %s440 = smul.u32 2, %s18
          %p441 = scmp.lt.s32.totalorder %s440, 3
          %s442 = scalar_select %p441, %s440, 3
          %s443 = scalar_lea.vmem %s5, %s442
          %s444 = smul.u32 2, %s18
        $region120: #{psi_train.1} parent=39 // pred_fallthru
          _
        // Predicated region
        $region121: #{psi_train.1} parent=39 // pred_check
          %p445 = pneg %p179
        $region122: #{psi_train.1} parent=39 // pred_check_branch
          %447 = sbr.rel (%p445) target = $region124
        $region123: #{psi_train.1} parent=39 // pred_region
          %s448 = smul.u32 32, %s18
          %p449 = scmp.lt.s32.totalorder %s448, 63
          %s450 = scalar_select %p449, %s448, 63
          %s451 = smul.addr %s450, 4
          %s452 = scalar_lea.vmem %s6, %s451
          %s453 = smul.u32 32, %s18
        $region124: #{psi_train.1} parent=39 // pred_fallthru
          _
      $region40: #{psi_train.1} parent=5 // pred_fallthru
        _
      %p454 = scmp.le.s32.totalorder 1, %s18
      %p455 = scmp.lt.s32.totalorder %s18, 3
      %p456 = pnand %p454, %p455
      %p457 = pneg %p456
      // Predicated region
      $region125: #{psi_train.1} parent=5 // pred_check
        _
      $region126: #{psi_train.1} parent=5 // pred_check_branch
        %459 = sbr.rel (%p456) target = $region128
      $region127: #{psi_train.1} parent=5 // pred_region
        %s460 = ssub.s32 %s18, 1
        %s461 = sand.u32 %s94, 1
        %s462 = sand.u32 %s94, 1
        %s463 = smul.addr %s462, 32
        %s464 = scalar_lea.vmem [#allocation6], %s463
        // Predicated region
        $region129: #{psi_train.1} parent=127 // pred_check
          %p465 = pneg %p107
        $region130: #{psi_train.1} parent=127 // pred_check_branch
          %467 = sbr.rel (%p465) target = $region132
        $region131: #{psi_train.1} parent=127 // pred_region
          _
        $region132: #{psi_train.1} parent=127 // pred_fallthru
          _
        %s468 = sand.u32 %s120, 1
        %s469 = sand.u32 %s120, 1
        %s470 = smul.addr %s469, 32
        %s471 = scalar_lea.vmem [#allocation7], %s470
        // Predicated region
        $region133: #{psi_train.1} parent=127 // pred_check
          %p472 = pneg %p133
        $region134: #{psi_train.1} parent=127 // pred_check_branch
          %474 = sbr.rel (%p472) target = $region136
        $region135: #{psi_train.1} parent=127 // pred_region
          _
        $region136: #{psi_train.1} parent=127 // pred_fallthru
          _
        %p475 = pneg %p39
        %p476 = pneg %p36
        %p477 = pneg %p60
        %p478 = pneg %p57
        %p479 = pneg %p81
        %p480 = pneg %p78
        %s481 = sand.u32 %s94, 1
        %s482 = sand.u32 %s94, 1
        %s483 = smul.addr %s482, 32
        %s484 = scalar_lea.vmem [#allocation6], %s483
        %p485 = pneg %p107
        %p486 = pneg %p104
        %s487 = sand.u32 %s120, 1
        %s488 = sand.u32 %s120, 1
        %s489 = smul.addr %s488, 32
        %s490 = scalar_lea.vmem [#allocation7], %s489
        %p491 = pneg %p133
        %p492 = pneg %p130
        %s493 = smul.u32 2, %s23
        %p494 = scmp.lt.s32.totalorder %s493, 3
        %s495 = scalar_select %p494, %s493, 3
        %s496 = scalar_lea.vmem %s5, %s495
        %p497 = pneg %p159
        %p498 = pneg %p156
        %s499 = smul.u32 32, %s23
        %p500 = scmp.lt.s32.totalorder %s499, 63
        %s501 = scalar_select %p500, %s499, 63
        %s502 = smul.addr %s501, 4
        %s503 = scalar_lea.vmem %s6, %s502
        %p504 = pneg %p185
        %p505 = pneg %p182
        %p506 = pneg %p206
        %p507 = pneg %p203
        %p508 = pneg %p227
        %p509 = pneg %p224
        %p510 = pneg %p248
        %p511 = pneg %p245
        %p512 = pneg %p269
        %p513 = pneg %p266
        %p514 = pneg %p290
        %p515 = pneg %p287
        %s516 = smul.u32 2, %s23
        %s517 = smul.u32 2, %s23
        %s518 = smul.u32 2, %s23
        %p519 = scmp.lt.s32.totalorder %s518, 3
        %s520 = scalar_select %p519, %s518, 3
        %s521 = scalar_lea.vmem %s5, %s520
        %s522 = smul.u32 2, %s23
        %s523 = smul.u32 32, %s23
        %p524 = scmp.lt.s32.totalorder %s523, 63
        %s525 = scalar_select %p524, %s523, 63
        %s526 = smul.addr %s525, 4
        %s527 = scalar_lea.vmem %s6, %s526
        %s528 = smul.u32 32, %s23
        %v530 = vld [vmem:[%s0] sm:$0xff]
        %p531 = scmp.eq.s32.totalorder %s23, 0
        // Predicated region
        $region137: #{psi_train.1} parent=127 // pred_check
          %p532 = pneg %p531
        $region138: #{psi_train.1} parent=127 // pred_check_branch
          %534 = sbr.rel (%p532) target = $region140
        $region139: #{psi_train.1} parent=127 // pred_region
          %vm535 = vcmask 261120
          %v537 = vsel %vm535, %v530, 0
          %539 = vmatpush.xpose.msra.mxu0 0.0
          %540 = vmatpush.xpose.msra.mxu0 0.0
          %541 = vmatpush.xpose.msra.mxu0 0.0
          %542 = vmatpush.xpose.msra.mxu0 0.0
          %543 = vmatpush.xpose.msra.mxu0 0.0
          %544 = vmatpush.xpose.msra.mxu0 0.0
          %545 = vmatpush.xpose.msra.mxu0 0.0
          %546 = vmatpush.xpose.msra.mxu0 0.0
          %547 = vmatpush.xpose.msra.mxu0 0.0
          %548 = vmatpush.xpose.msra.mxu0 0.0
          %549 = vmatpush.xpose.msra.mxu0 0.0
          %550 = vmatpush.xpose.msra.mxu0 0.0
          %551 = vmatpush.xpose.msra.mxu0 0.0
          %552 = vmatpush.xpose.msra.mxu0 0.0
          %553 = vmatpush.xpose.msra.mxu0 0.0
          %554 = vmatpush.xpose.msra.mxu0 %v537
          %555 = vmatmul.f32.gmra.mxu0 %v537
          %v556 = vpop.f32.mrf.mxu0
          %v557 = vadd.f32 0.0, %v556
          %558 = vdwg.mxu0
          %v559 = vlaneseq
          %v560 = vshrl.u32 %v559, 7
          %v561 = vlaneseq
          %v562 = vand.u32 %v561, 127
          %vm563 = vcmp.eq.s32.totalorder %v560, %v562
          %v564 = vsel %vm563, %v557, 0.0
          %vm565 = vcmask 64512
          %v566 = vsel %vm565, %v564, 0.0
          %v567 = vrot.slane %v566, 4
          %v568 = vadd.f32 %v566, %v567
          %v569 = vrot.slane %v568, 2
          %v570 = vadd.f32 %v568, %v569
          %v571 = vrot.slane %v570, 1
          %v572 = vadd.f32 %v570, %v571
          %v573 = vmul.f32 %v557, 2.0
          %v574 = vsub.f32 %v572, %v573
          %v575 = vld [vmem:[%s1] sm:$0xff]
          %v576 = vld [vmem:[%s2] sm:$0x1]
          %577 = vset.pattern.permute.xlu0 0
          %578 = vperm.xlu0 %577, %v575
          %v579 = vpop.permute.xlu0 %578
          %v580 = vperm.slane %v576, 0
          %vm581 = vcmp.eq.s32.totalorder %v579, %v580
          %vm582 = vmxor %vm563, 1
          %vm583 = vmand %vm581, %vm582
          %v584 = vsel %vm583, %v574, inf
          %v585 = vsel %vm565, %v584, inf
          %586 = vmin.xlane.f32.xlu0 %v585
          %v587 = vpop.xlane.xlu0 %586
          %vm588 = vcmp.eq.f32.partialorder %v584, %v587
          %v589 = vsel %vm588, %v562, 8
          %v590 = vsel %vm565, %v589, 2147483647
          %v591 = vand.u32 %v590, 65535
          %v592 = vshra.s32 %v590, 16
          %v593 = vcvt.s32.f32 %v591
          %v594 = vcvt.s32.f32 %v592
          %595 = vmin.xlane.f32.xlu0 %v594
          %v596 = vpop.xlane.xlu0 %595
          %vm597 = vcmp.eq.f32.partialorder %v594, %v596
          %v598 = vsel %vm597, %v593, inf
          %599 = vmin.xlane.f32.xlu0 %v598
          %v600 = vpop.xlane.xlu0 %599
          %v601 = vcvt.f32.s32 %v600
          %v602 = vcvt.f32.s32 %v596
          %v603 = vshll.u32 %v602, 16
          %v604 = vadd.s32 %v603, %v601
          %vm605 = vmor %vm581, %vm563
          %v606 = vsel %vm605, inf, %v574
          %v607 = vsel %vm565, %v606, inf
          %608 = vmin.xlane.f32.xlu0 %v607
          %v609 = vpop.xlane.xlu0 %608
          %vm610 = vcmp.eq.f32.partialorder %v606, %v609
          %v611 = vsel %vm610, %v562, 8
          %v612 = vsel %vm565, %v611, 2147483647
          %v613 = vand.u32 %v612, 65535
          %v614 = vshra.s32 %v612, 16
          %v615 = vcvt.s32.f32 %v613
          %v616 = vcvt.s32.f32 %v614
          %617 = vmin.xlane.f32.xlu0 %v616
          %v618 = vpop.xlane.xlu0 %617
          %vm619 = vcmp.eq.f32.partialorder %v616, %v618
          %v620 = vsel %vm619, %v615, inf
          %621 = vmin.xlane.f32.xlu0 %v620
          %v622 = vpop.xlane.xlu0 %621
          %v623 = vcvt.f32.s32 %v622
          %v624 = vcvt.f32.s32 %v618
          %v625 = vshll.u32 %v624, 16
          %v626 = vadd.s32 %v625, %v623
          %vm627 = vcmp.eq.s32.totalorder %v562, 0
          %vm628 = vcmp.eq.s32.totalorder %v562, 1
          %v629 = vsel %vm628, %v626, 0
          %v630 = vsel %vm627, %v604, %v629
          %631 = vst [vmem:[#allocation5] sm:$0xff] %v630
          %632 = vset.pattern.permute.xlu0 0
          %633 = vperm.xlu0 %632, %v604
          %v634 = vpop.permute.xlu0 %633
          %635 = vset.pattern.permute.xlu0 0
          %636 = vperm.xlu0 %635, %v626
          %v637 = vpop.permute.xlu0 %636
          %vm638 = vcmp.eq.s32.totalorder %v562, %v634
          %vm639 = vcmp.eq.s32.totalorder %v562, %v637
          %v640 = vsel %vm638, 1.0, 0.0
          %v641 = vsel %vm639, 1.0, 0.0
          %v643 = vsel %vm565, %v640, 0
          %v646 = vsel %vm565, %v641, 0
          %648 = vmatpush.msra.mxu0 0.0
          %649 = vmatpush.msra.mxu0 0.0
          %650 = vmatpush.msra.mxu0 0.0
          %651 = vmatpush.msra.mxu0 0.0
          %652 = vmatpush.msra.mxu0 0.0
          %653 = vmatpush.msra.mxu0 0.0
          %654 = vmatpush.msra.mxu0 0.0
          %655 = vmatpush.msra.mxu0 0.0
          %656 = vmatpush.msra.mxu0 0.0
          %657 = vmatpush.msra.mxu0 0.0
          %658 = vmatpush.msra.mxu0 0.0
          %659 = vmatpush.msra.mxu0 0.0
          %660 = vmatpush.msra.mxu0 0.0
          %661 = vmatpush.msra.mxu0 0.0
          %662 = vmatpush.msra.mxu0 0.0
          %663 = vmatpush.msra.mxu0 %v530
          %664 = vmatmul.f32.gmra.mxu0 %v643
          %v665 = vpop.f32.mrf.mxu0
          %v666 = vadd.f32 0.0, %v665
          %667 = vmatmul.f32.gmra.mxu0 %v646
          %v668 = vpop.f32.mrf.mxu0
          %v669 = vadd.f32 0.0, %v668
          %670 = vdwg.mxu0
          %671 = vst.msk [vmem:[#allocation2] sm:$0xff] %vm535, %v666
          %672 = vst.msk [vmem:[#allocation2 + $0x8] sm:$0xff] %vm535, %v669
          %673 = vst.msk [vmem:[#allocation3] sm:$0xff] %vm535, 0.0
          %674 = vst.msk [vmem:[#allocation3 + $0x8] sm:$0xff] %vm535, 0.0
        $region140: #{psi_train.1} parent=127 // pred_fallthru
          _
        %v675 = vpack.c.bf16 %v530, %v530
        %v676 = vld [vmem:[#allocation2] sm:$0xff]
        %v677 = vld [vmem:[#allocation2 + $0x8] sm:$0xff]
        %v678 = vpack.c.bf16 %v677, %v676
        %v679 = vld [vmem:[%s464] sm:$0xff]
        %v680 = vld [vmem:[%s464 + $0x8] sm:$0xff]
        %v681 = vld [vmem:[%s464 + $0x10] sm:$0xff]
        %v682 = vld [vmem:[%s464 + $0x18] sm:$0xff]
        %v687 = vunpack.c.l.b16 %v679
        %v688 = vunpack.c.h.b16 %v679
        %v689 = vunpack.c.l.b16 %v680
        %v690 = vunpack.c.h.b16 %v680
        %v691 = vunpack.c.l.b16 %v681
        %v692 = vunpack.c.h.b16 %v681
        %v693 = vunpack.c.l.b16 %v682
        %v694 = vunpack.c.h.b16 %v682
        %v695 = vpack.c.b16 %v689, %v687
        %v696 = vpack.c.b16 %v690, %v688
        %v697 = vpack.c.b16 %v693, %v691
        %v698 = vpack.c.b16 %v694, %v692
        %vm703 = vcmask 261120
        %v705 = vsel %vm703, %v675, 0
        %707 = vmatpush.bf16.msra.mxu0 0
        %708 = vmatpush.bf16.msra.mxu0 0
        %709 = vmatpush.bf16.msra.mxu0 0
        %710 = vmatpush.bf16.msra.mxu0 0
        %711 = vmatpush.bf16.msra.mxu0 0
        %712 = vmatpush.bf16.msra.mxu0 0
        %713 = vmatpush.bf16.msra.mxu0 %v697
        %714 = vmatpush.bf16.msra.mxu0 %v695
        %715 = vmatmul.bf16.gmra.mxu0 %v705
        %v716 = vpop.f32.mrf.mxu0
        %v717 = vadd.f32 0.0, %v716
        %v718 = vpop.f32.mrf.mxu0
        %719 = vdwg.mxu0
        %720 = vmatpush.bf16.msra.mxu0 0
        %721 = vmatpush.bf16.msra.mxu0 0
        %722 = vmatpush.bf16.msra.mxu0 0
        %723 = vmatpush.bf16.msra.mxu0 0
        %724 = vmatpush.bf16.msra.mxu0 0
        %725 = vmatpush.bf16.msra.mxu0 0
        %726 = vmatpush.bf16.msra.mxu0 %v698
        %727 = vmatpush.bf16.msra.mxu0 %v696
        %728 = vmatmul.bf16.gmra.mxu0 %v705
        %v729 = vpop.f32.mrf.mxu0
        %v730 = vadd.f32 0.0, %v729
        %v731 = vpop.f32.mrf.mxu0
        %732 = vdwg.mxu0
        %v733 = vld [vmem:[%s471] sm:$0xff]
        %v734 = vld [vmem:[%s471 + $0x8] sm:$0xff]
        %v735 = vld [vmem:[%s471 + $0x10] sm:$0xff]
        %v736 = vld [vmem:[%s471 + $0x18] sm:$0xff]
        %v741 = vunpack.c.l.b16 %v733
        %v742 = vunpack.c.h.b16 %v733
        %v743 = vunpack.c.l.b16 %v734
        %v744 = vunpack.c.h.b16 %v734
        %v745 = vunpack.c.l.b16 %v735
        %v746 = vunpack.c.h.b16 %v735
        %v747 = vunpack.c.l.b16 %v736
        %v748 = vunpack.c.h.b16 %v736
        %v749 = vpack.c.b16 %v743, %v741
        %v750 = vpack.c.b16 %v744, %v742
        %v751 = vpack.c.b16 %v747, %v745
        %v752 = vpack.c.b16 %v748, %v746
        %v758 = vsel %vm703, %v678, 0
        %760 = vmatpush.bf16.msra.mxu0 0
        %761 = vmatpush.bf16.msra.mxu0 0
        %762 = vmatpush.bf16.msra.mxu0 0
        %763 = vmatpush.bf16.msra.mxu0 0
        %764 = vmatpush.bf16.msra.mxu0 0
        %765 = vmatpush.bf16.msra.mxu0 0
        %766 = vmatpush.bf16.msra.mxu0 %v751
        %767 = vmatpush.bf16.msra.mxu0 %v749
        %768 = vmatmul.bf16.gmra.mxu0 %v758
        %v769 = vpop.f32.mrf.mxu0
        %v770 = vadd.f32 0.0, %v769
        %v771 = vpop.f32.mrf.mxu0
        %v772 = vadd.f32 0.0, %v771
        %773 = vdwg.mxu0
        %774 = vmatpush.bf16.msra.mxu0 0
        %775 = vmatpush.bf16.msra.mxu0 0
        %776 = vmatpush.bf16.msra.mxu0 0
        %777 = vmatpush.bf16.msra.mxu0 0
        %778 = vmatpush.bf16.msra.mxu0 0
        %779 = vmatpush.bf16.msra.mxu0 0
        %780 = vmatpush.bf16.msra.mxu0 %v752
        %781 = vmatpush.bf16.msra.mxu0 %v750
        %782 = vmatmul.bf16.gmra.mxu0 %v758
        %v783 = vpop.f32.mrf.mxu0
        %v784 = vadd.f32 0.0, %v783
        %v785 = vpop.f32.mrf.mxu0
        %v786 = vadd.f32 0.0, %v785
        %787 = vdwg.mxu0
        %v788 = vadd.f32 %v717, %v770
        %v789 = vadd.f32 %v730, %v784
        %v790 = vadd.f32 %v717, %v772
        %v791 = vadd.f32 %v730, %v786
        %v792 = vld [vmem:[%s521] sm:$0x3]
        %v794 = vperm.slane %v792, 0
        %v795 = vperm.slane %v792, 1
        %v798 = vadd.f32 %v788, %v794
        %v799 = vadd.f32 %v789, %v795
        %v800 = vadd.f32 %v790, %v794
        %v801 = vadd.f32 %v791, %v795
        %v802 = vld [vmem:[#allocation3] sm:$0xff]
        %v803 = vld [vmem:[#allocation3 + $0x8] sm:$0xff]
        %v804 = vpack.c.bf16 %v800, %v798
        %v805 = vpack.c.bf16 %v801, %v799
        %v806 = vld [vmem:[%s527] sm:$0xf]
        %v807 = vld [vmem:[%s527 + $0x4] sm:$0xf]
        %v808 = vld [vmem:[%s527 + $0x8] sm:$0xf]
        %v809 = vld [vmem:[%s527 + $0xc] sm:$0xf]
        %v810 = vld [vmem:[%s527 + $0x10] sm:$0xf]
        %v811 = vld [vmem:[%s527 + $0x14] sm:$0xf]
        %v812 = vld [vmem:[%s527 + $0x18] sm:$0xf]
        %v813 = vld [vmem:[%s527 + $0x1c] sm:$0xf]
        %v814 = vld [vmem:[%s527 + $0x20] sm:$0xf]
        %v815 = vld [vmem:[%s527 + $0x24] sm:$0xf]
        %v816 = vld [vmem:[%s527 + $0x28] sm:$0xf]
        %v817 = vld [vmem:[%s527 + $0x2c] sm:$0xf]
        %v818 = vld [vmem:[%s527 + $0x30] sm:$0xf]
        %v819 = vld [vmem:[%s527 + $0x34] sm:$0xf]
        %v820 = vld [vmem:[%s527 + $0x38] sm:$0xf]
        %v821 = vld [vmem:[%s527 + $0x3c] sm:$0xf]
        %v822 = vld [vmem:[%s527 + $0x40] sm:$0xf]
        %v823 = vld [vmem:[%s527 + $0x44] sm:$0xf]
        %v824 = vld [vmem:[%s527 + $0x48] sm:$0xf]
        %v825 = vld [vmem:[%s527 + $0x4c] sm:$0xf]
        %v826 = vld [vmem:[%s527 + $0x50] sm:$0xf]
        %v827 = vld [vmem:[%s527 + $0x54] sm:$0xf]
        %v828 = vld [vmem:[%s527 + $0x58] sm:$0xf]
        %v829 = vld [vmem:[%s527 + $0x5c] sm:$0xf]
        %v830 = vld [vmem:[%s527 + $0x60] sm:$0xf]
        %v831 = vld [vmem:[%s527 + $0x64] sm:$0xf]
        %v832 = vld [vmem:[%s527 + $0x68] sm:$0xf]
        %v833 = vld [vmem:[%s527 + $0x6c] sm:$0xf]
        %v834 = vld [vmem:[%s527 + $0x70] sm:$0xf]
        %v835 = vld [vmem:[%s527 + $0x74] sm:$0xf]
        %v836 = vld [vmem:[%s527 + $0x78] sm:$0xf]
        %v837 = vld [vmem:[%s527 + $0x7c] sm:$0xf]
        %v870 = vunpack.c.l.b16 %v806
        %v871 = vunpack.c.l.b16 %v807
        %v872 = vunpack.c.l.b16 %v808
        %v873 = vunpack.c.l.b16 %v809
        %v874 = vunpack.c.l.b16 %v810
        %v875 = vunpack.c.l.b16 %v811
        %v876 = vunpack.c.l.b16 %v812
        %v877 = vunpack.c.l.b16 %v813
        %v878 = vunpack.c.l.b16 %v814
        %v879 = vunpack.c.l.b16 %v815
        %v880 = vunpack.c.l.b16 %v816
        %v881 = vunpack.c.l.b16 %v817
        %v882 = vunpack.c.l.b16 %v818
        %v883 = vunpack.c.l.b16 %v819
        %v884 = vunpack.c.l.b16 %v820
        %v885 = vunpack.c.l.b16 %v821
        %v886 = vunpack.c.l.b16 %v822
        %v887 = vunpack.c.l.b16 %v823
        %v888 = vunpack.c.l.b16 %v824
        %v889 = vunpack.c.l.b16 %v825
        %v890 = vunpack.c.l.b16 %v826
        %v891 = vunpack.c.l.b16 %v827
        %v892 = vunpack.c.l.b16 %v828
        %v893 = vunpack.c.l.b16 %v829
        %v894 = vunpack.c.l.b16 %v830
        %v895 = vunpack.c.l.b16 %v831
        %v896 = vunpack.c.l.b16 %v832
        %v897 = vunpack.c.l.b16 %v833
        %v898 = vunpack.c.l.b16 %v834
        %v899 = vunpack.c.l.b16 %v835
        %v900 = vunpack.c.l.b16 %v836
        %v901 = vunpack.c.l.b16 %v837
        %v902 = vpack.c.b16 %v871, %v870
        %v903 = vpack.c.b16 %v873, %v872
        %v904 = vpack.c.b16 %v875, %v874
        %v905 = vpack.c.b16 %v877, %v876
        %v906 = vpack.c.b16 %v879, %v878
        %v907 = vpack.c.b16 %v881, %v880
        %v908 = vpack.c.b16 %v883, %v882
        %v909 = vpack.c.b16 %v885, %v884
        %v910 = vpack.c.b16 %v887, %v886
        %v911 = vpack.c.b16 %v889, %v888
        %v912 = vpack.c.b16 %v891, %v890
        %v913 = vpack.c.b16 %v893, %v892
        %v914 = vpack.c.b16 %v895, %v894
        %v915 = vpack.c.b16 %v897, %v896
        %v916 = vpack.c.b16 %v899, %v898
        %v917 = vpack.c.b16 %v901, %v900
        %934 = vmatpush.bf16.msra.mxu0 %v909
        %935 = vmatpush.bf16.msra.mxu0 %v908
        %936 = vmatpush.bf16.msra.mxu0 %v907
        %937 = vmatpush.bf16.msra.mxu0 %v906
        %938 = vmatpush.bf16.msra.mxu0 %v905
        %939 = vmatpush.bf16.msra.mxu0 %v904
        %940 = vmatpush.bf16.msra.mxu0 %v903
        %941 = vmatpush.bf16.msra.mxu0 %v902
        %942 = vmatmul.bf16.gmra.mxu0 %v804
        %v943 = vpop.f32.mrf.mxu0
        %v944 = vadd.f32 0.0, %v943
        %v945 = vpop.f32.mrf.mxu0
        %v946 = vadd.f32 0.0, %v945
        %947 = vdwg.mxu0
        %948 = vmatpush.bf16.msra.mxu0 %v917
        %949 = vmatpush.bf16.msra.mxu0 %v916
        %950 = vmatpush.bf16.msra.mxu0 %v915
        %951 = vmatpush.bf16.msra.mxu0 %v914
        %952 = vmatpush.bf16.msra.mxu0 %v913
        %953 = vmatpush.bf16.msra.mxu0 %v912
        %954 = vmatpush.bf16.msra.mxu0 %v911
        %955 = vmatpush.bf16.msra.mxu0 %v910
        %956 = vmatmul.bf16.gmra.mxu0 %v805
        %v957 = vpop.f32.mrf.mxu0
        %v958 = vadd.f32 %v944, %v957
        %v959 = vpop.f32.mrf.mxu0
        %v960 = vadd.f32 %v946, %v959
        %961 = vdwg.mxu0
        %v962 = vadd.f32 %v802, %v958
        %v963 = vadd.f32 %v803, %v960
        %964 = vst.msk [vmem:[#allocation3] sm:$0xff] %vm703, %v962
        %965 = vst.msk [vmem:[#allocation3 + $0x8] sm:$0xff] %vm703, %v963
        %p966 = scmp.eq.s32.totalorder %s23, 1
        // Predicated region
        $region141: #{psi_train.1} parent=127 // pred_check
          %p967 = pneg %p966
        $region142: #{psi_train.1} parent=127 // pred_check_branch
          %969 = sbr.rel (%p967) target = $region144
        $region143: #{psi_train.1} parent=127 // pred_region
          %v970 = vld [vmem:[#allocation2] sm:$0xff]
          %v971 = vld [vmem:[#allocation2 + $0x8] sm:$0xff]
          %v972 = vld [vmem:[#allocation3] sm:$0xff]
          %v973 = vld [vmem:[#allocation3 + $0x8] sm:$0xff]
          %v974 = vld [vmem:[%s7] sm:$0x1]
          %v976 = vperm.slane %v974, 0
          %v978 = vadd.f32 %v972, %v976
          %v979 = vadd.f32 %v973, %v976
          %v980 = vmul.f32 %v978, %v530
          %v981 = vmul.f32 %v979, %v530
          %v982 = vxor.u32 %v980, 2147483648
          %v983 = vxor.u32 %v981, 2147483648
          %v984 = vmul.f32 %v982, 1.442695
          %v985 = vpow.pop %v984
          %v986 = vmul.f32 %v983, 1.442695
          %v987 = vpow.pop %v986
          %v988 = vadd.f32 %v985, 1.0
          %v989 = vadd.f32 %v987, 1.0
          %v990 = vrcp.pop %v988
          %v991 = vmul.f32 %v988, %v990
          %v992 = vsub.f32 1.0, %v991
          %v993 = vmul.f32 %v990, %v992
          %v994 = vadd.f32 %v990, %v993
          %vm995 = vweird.f32 %v988
          %vm996 = vweird.f32 %v990
          %vm997 = vmor %vm995, %vm996
          %v998 = vsel %vm997, %v990, %v994
          %v999 = vand.u32 2147483647, %v988
          %vm1000 = vcmp.eq.f32.partialorder %v999, 8.507059e+37
          %v1001 = vand.u32 %v988, 2147483648
          %v1002 = vor.u32 1.1754944e-38, %v1001
          %v1003 = vsel %vm1000, %v1002, %v998
          %v1004 = vmul.f32 1.0, %v1003
          %v1005 = vrcp.pop %v989
          %v1006 = vmul.f32 %v989, %v1005
          %v1007 = vsub.f32 1.0, %v1006
          %v1008 = vmul.f32 %v1005, %v1007
          %v1009 = vadd.f32 %v1005, %v1008
          %vm1010 = vweird.f32 %v989
          %vm1011 = vweird.f32 %v1005
          %vm1012 = vmor %vm1010, %vm1011
          %v1013 = vsel %vm1012, %v1005, %v1009
          %v1014 = vand.u32 2147483647, %v989
          %vm1015 = vcmp.eq.f32.partialorder %v1014, 8.507059e+37
          %v1016 = vand.u32 %v989, 2147483648
          %v1017 = vor.u32 1.1754944e-38, %v1016
          %v1018 = vsel %vm1015, %v1017, %v1013
          %v1019 = vmul.f32 1.0, %v1018
          %v1020 = vmul.f32 %v978, %v970
          %v1021 = vmul.f32 %v979, %v971
          %v1022 = vxor.u32 %v1020, 2147483648
          %v1023 = vxor.u32 %v1021, 2147483648
          %v1024 = vmul.f32 %v1022, 1.442695
          %v1025 = vpow.pop %v1024
          %v1026 = vmul.f32 %v1023, 1.442695
          %v1027 = vpow.pop %v1026
          %v1028 = vadd.f32 %v1025, 1.0
          %v1029 = vadd.f32 %v1027, 1.0
          %v1030 = vrcp.pop %v1028
          %v1031 = vmul.f32 %v1028, %v1030
          %v1032 = vsub.f32 1.0, %v1031
          %v1033 = vmul.f32 %v1030, %v1032
          %v1034 = vadd.f32 %v1030, %v1033
          %vm1035 = vweird.f32 %v1028
          %vm1036 = vweird.f32 %v1030
          %vm1037 = vmor %vm1035, %vm1036
          %v1038 = vsel %vm1037, %v1030, %v1034
          %v1039 = vand.u32 2147483647, %v1028
          %vm1040 = vcmp.eq.f32.partialorder %v1039, 8.507059e+37
          %v1041 = vand.u32 %v1028, 2147483648
          %v1042 = vor.u32 1.1754944e-38, %v1041
          %v1043 = vsel %vm1040, %v1042, %v1038
          %v1044 = vmul.f32 1.0, %v1043
          %v1045 = vrcp.pop %v1029
          %v1046 = vmul.f32 %v1029, %v1045
          %v1047 = vsub.f32 1.0, %v1046
          %v1048 = vmul.f32 %v1045, %v1047
          %v1049 = vadd.f32 %v1045, %v1048
          %vm1050 = vweird.f32 %v1029
          %vm1051 = vweird.f32 %v1045
          %vm1052 = vmor %vm1050, %vm1051
          %v1053 = vsel %vm1052, %v1045, %v1049
          %v1054 = vand.u32 2147483647, %v1029
          %vm1055 = vcmp.eq.f32.partialorder %v1054, 8.507059e+37
          %v1056 = vand.u32 %v1029, 2147483648
          %v1057 = vor.u32 1.1754944e-38, %v1056
          %v1058 = vsel %vm1055, %v1057, %v1053
          %v1059 = vmul.f32 1.0, %v1058
          %v1060 = vmul.f32 %v1004, %v530
          %v1061 = vmul.f32 %v1019, %v530
          %v1062 = vadd.f32 %v1060, %v530
          %v1063 = vadd.f32 %v1061, %v530
          %v1064 = vpack.c.bf16 %v1062, %v1062
          %v1065 = vpack.c.bf16 %v1063, %v1063
          %vm1066 = vcmask 257024
          %1067 = vst.msk [vmem:[#allocation4] sm:$0xf] %vm1066, %v1064
          %1068 = vst.msk [vmem:[#allocation4 + $0x4] sm:$0xf] %vm1066, %v1065
          %v1069 = vmul.f32 %v1044, %v530
          %v1070 = vmul.f32 %v1059, %v530
          %v1071 = vadd.f32 %v1069, %v530
          %v1072 = vadd.f32 %v1070, %v530
          %v1073 = vpack.c.bf16 %v1071, %v1071
          %v1074 = vpack.c.bf16 %v1072, %v1072
          %1075 = vst.msk [vmem:[#allocation4 + $0x8] sm:$0xf] %vm1066, %v1073
          %1076 = vst.msk [vmem:[#allocation4 + $0xc] sm:$0xf] %vm1066, %v1074
          %v1077 = vmul.f32 %v1044, %v970
          %v1078 = vmul.f32 %v1059, %v971
          %v1079 = vadd.f32 %v1077, %v970
          %v1080 = vadd.f32 %v1078, %v971
          %v1081 = vpack.c.bf16 %v1079, %v1079
          %v1082 = vpack.c.bf16 %v1080, %v1080
          %1083 = vst.msk [vmem:[#allocation4 + $0x10] sm:$0xf] %vm1066, %v1081
          %1084 = vst.msk [vmem:[#allocation4 + $0x14] sm:$0xf] %vm1066, %v1082
          %v1085 = vmul.f32 %v1004, %v970
          %v1086 = vmul.f32 %v1019, %v971
          %v1087 = vadd.f32 %v1085, %v970
          %v1088 = vadd.f32 %v1086, %v971
          %v1089 = vpack.c.bf16 %v1087, %v1087
          %v1090 = vpack.c.bf16 %v1088, %v1088
          %1091 = vst.msk [vmem:[#allocation4 + $0x18] sm:$0xf] %vm1066, %v1089
          %1092 = vst.msk [vmem:[#allocation4 + $0x1c] sm:$0xf] %vm1066, %v1090
          %v1093 = vld [vmem:[#allocation4] sm:$0xf]
          %v1094 = vld [vmem:[#allocation4 + $0x4] sm:$0xf]
          %v1095 = vld [vmem:[#allocation4 + $0x8] sm:$0xf]
          %v1096 = vld [vmem:[#allocation4 + $0xc] sm:$0xf]
          %v1097 = vld [vmem:[#allocation4 + $0x10] sm:$0xf]
          %v1098 = vld [vmem:[#allocation4 + $0x14] sm:$0xf]
          %v1099 = vld [vmem:[#allocation4 + $0x18] sm:$0xf]
          %v1100 = vld [vmem:[#allocation4 + $0x1c] sm:$0xf]
          %v1101 = vld [vmem:[%s8] sm:$0xf]
          %v1102 = vld [vmem:[%s8 + $0x4] sm:$0xf]
          %v1103 = vld [vmem:[%s8 + $0x8] sm:$0xf]
          %v1104 = vld [vmem:[%s8 + $0xc] sm:$0xf]
          %v1105 = vld [vmem:[%s9] sm:$0x1]
          %v1107 = vperm.slane %v1105, 0
          %v1117 = vunpack.c.l.b16 %v1093
          %v1118 = vunpack.c.l.b16 %v1094
          %v1119 = vunpack.c.l.b16 %v1095
          %v1120 = vunpack.c.l.b16 %v1096
          %v1121 = vunpack.c.l.b16 %v1097
          %v1122 = vunpack.c.l.b16 %v1098
          %v1123 = vunpack.c.l.b16 %v1099
          %v1124 = vunpack.c.l.b16 %v1100
          %v1125 = vpack.c.b16 %v1118, %v1117
          %v1126 = vpack.c.b16 %v1120, %v1119
          %v1127 = vpack.c.b16 %v1122, %v1121
          %v1128 = vpack.c.b16 %v1124, %v1123
          %v1133 = vunpack.c.l.b16 %v1101
          %v1134 = vunpack.c.l.b16 %v1102
          %v1135 = vunpack.c.l.b16 %v1103
          %v1136 = vunpack.c.l.b16 %v1104
          %v1137 = vpack.c.b16 %v1134, %v1133
          %v1138 = vpack.c.b16 %v1136, %v1135
          %v1142 = vsel %vm703, %v1125, 0
          %v1145 = vsel %vm703, %v1126, 0
          %v1148 = vsel %vm703, %v1127, 0
          %v1151 = vsel %vm703, %v1128, 0
          %1153 = vmatpush.bf16.msra.mxu0 0
          %1154 = vmatpush.bf16.msra.mxu0 0
          %1155 = vmatpush.bf16.msra.mxu0 0
          %1156 = vmatpush.bf16.msra.mxu0 0
          %1157 = vmatpush.bf16.msra.mxu0 0
          %1158 = vmatpush.bf16.msra.mxu0 0
          %1159 = vmatpush.bf16.msra.mxu0 %v1138
          %1160 = vmatpush.bf16.msra.mxu0 %v1137
          %1161 = vmatmul.bf16.gmra.mxu0 %v1142
          %v1162 = vpop.f32.mrf.mxu0
          %v1163 = vadd.f32 %v1107, %v1162
          %v1164 = vpop.f32.mrf.mxu0
          %v1165 = vadd.f32 %v1107, %v1164
          %1166 = vmatmul.bf16.gmra.mxu0 %v1145
          %v1167 = vpop.f32.mrf.mxu0
          %v1168 = vadd.f32 %v1107, %v1167
          %v1169 = vpop.f32.mrf.mxu0
          %v1170 = vadd.f32 %v1107, %v1169
          %1171 = vmatmul.bf16.gmra.mxu0 %v1148
          %v1172 = vpop.f32.mrf.mxu0
          %v1173 = vadd.f32 %v1107, %v1172
          %v1174 = vpop.f32.mrf.mxu0
          %v1175 = vadd.f32 %v1107, %v1174
          %1176 = vmatmul.bf16.gmra.mxu0 %v1151
          %v1177 = vpop.f32.mrf.mxu0
          %v1178 = vadd.f32 %v1107, %v1177
          %v1179 = vpop.f32.mrf.mxu0
          %v1180 = vadd.f32 %v1107, %v1179
          %1181 = vdwg.mxu0
          %1182 = vst [vmem:[%s10] sm:$0xff] %v1163
          %1183 = vst [vmem:[%s10 + $0x8] sm:$0xff] %v1165
          %1184 = vst [vmem:[%s10 + $0x10] sm:$0xff] %v1168
          %1185 = vst [vmem:[%s10 + $0x18] sm:$0xff] %v1170
          %1186 = vst [vmem:[%s10 + $0x20] sm:$0xff] %v1173
          %1187 = vst [vmem:[%s10 + $0x28] sm:$0xff] %v1175
          %1188 = vst [vmem:[%s10 + $0x30] sm:$0xff] %v1178
          %1189 = vst [vmem:[%s10 + $0x38] sm:$0xff] %v1180
          %v1190 = vld [vmem:[#allocation5] sm:$0xff]
          %1191 = vst [vmem:[%s11] sm:$0xff] %v1190
        $region144: #{psi_train.1} parent=127 // pred_fallthru
          _
        // Predicated region
        $region145: #{psi_train.1} parent=127 // pred_check
          %p1192 = pneg %p266
        $region146: #{psi_train.1} parent=127 // pred_check_branch
          %1194 = sbr.rel (%p1192) target = $region148
        $region147: #{psi_train.1} parent=127 // pred_region
          _
        $region148: #{psi_train.1} parent=127 // pred_fallthru
          _
        // Predicated region
        $region149: #{psi_train.1} parent=127 // pred_check
          %p1195 = pneg %p287
        $region150: #{psi_train.1} parent=127 // pred_check_branch
          %1197 = sbr.rel (%p1195) target = $region152
        $region151: #{psi_train.1} parent=127 // pred_region
          _
        $region152: #{psi_train.1} parent=127 // pred_fallthru
          _
        // Predicated region
        $region153: #{psi_train.1} parent=127 // pred_check
          %p1198 = pneg %p266
        $region154: #{psi_train.1} parent=127 // pred_check_branch
          %1200 = sbr.rel (%p1198) target = $region156
        $region155: #{psi_train.1} parent=127 // pred_region
          _
        $region156: #{psi_train.1} parent=127 // pred_fallthru
          _
        // Predicated region
        $region157: #{psi_train.1} parent=127 // pred_check
          %p1201 = pneg %p287
        $region158: #{psi_train.1} parent=127 // pred_check_branch
          %1203 = sbr.rel (%p1201) target = $region160
        $region159: #{psi_train.1} parent=127 // pred_region
          _
        $region160: #{psi_train.1} parent=127 // pred_fallthru
          _
      $region128: #{psi_train.1} parent=5 // pred_fallthru
        _
      %p1204 = scmp.le.s32.totalorder 2, %s18
      // Predicated region
      $region161: #{psi_train.1} parent=5 // pred_check
        %p1205 = pneg %p1204
      $region162: #{psi_train.1} parent=5 // pred_check_branch
        %1207 = sbr.rel (%p1205) target = $region164
      $region163: #{psi_train.1} parent=5 // pred_region
        %s1208 = ssub.s32 %s18, 2
      $region164: #{psi_train.1} parent=5 // pred_fallthru
        _
    $region6: #{psi_train.1} parent=1 // loop_footer
      %s22 = sadd.s32 1, %s18
    $region7: #{psi_train.1} parent=1 // loop_footer_branch
      %17 = sbr.rel target = $region3
    $region8: #{psi_train.1} parent=1 // loop_exit
      _

</llo_original>
